<compile_context>
chip_gen: v6e
topology: v6e:2x2x1
jax: 0.10.0
libtpu: 0.0.40
codegen_flags: <defaults>
</compile_context>

<pallas_src>
import functools

import jax
import jax.numpy as jnp
from jax.experimental import pallas as pl
from jax.experimental.pallas import tpu as pltpu

D_IN = 28 * 28      # 784
H1 = 500
H1_PAD = 512        # fc1 out 500 -> 512 (lane aligned)
H2 = 256            # fc2 out, already lane aligned
D_OUT = 10
D_OUT_PAD = 128     # fc3 out 10 -> 128 (lane-dense unmasked stores)


def _mlp_kernel(x_ref, w1_ref, b1_ref, w2_ref, b2_ref, w3_ref, b3_ref, o_ref):
    # fc1 + ReLU  (bf16 operands, f32 accumulation on the MXU)
    h1 = jnp.dot(x_ref[...], w1_ref[...], preferred_element_type=jnp.float32)
    h1 = jnp.maximum(h1 + b1_ref[...], 0.0).astype(w2_ref.dtype)
    # fc2 + ReLU
    h2 = jnp.dot(h1, w2_ref[...], preferred_element_type=jnp.float32)
    h2 = jnp.maximum(h2 + b2_ref[...], 0.0).astype(w3_ref.dtype)
    # fc3 (no activation), padded to one full 128-lane vreg for unmasked stores
    out = jnp.dot(h2, w3_ref[...], preferred_element_type=jnp.float32)
    o_ref[...] = (out + b3_ref[...]).astype(o_ref.dtype)


def _round_up(v, m):
    return (v + m - 1) // m * m


@functools.partial(jax.jit, static_argnames=("tile_m",))
def mlp_forward(x_nchw, params, *, tile_m=256):
    """MLPNet forward: x.view(-1, 784) -> relu(fc1) -> relu(fc2) -> fc3."""
    w1, b1, w2, b2, w3, b3 = params
    n = x_nchw.shape[0]

    # ---- wrapper glue (plain JAX): flatten, transpose/pad weights, cast bf16 ----
    x = x_nchw.reshape(n, D_IN)

    # Batch tile: multiple of 8 sublanes; 256 (MXU-dim multiple) for real batches,
    # shrink for tiny batches so we don't DMA a mostly-empty tile.
    tile = min(tile_m, _round_up(max(n, 1), 8))
    n_pad = _round_up(n, tile)
    x = jnp.pad(x, ((0, n_pad - n), (0, 0))).astype(jnp.bfloat16)

    # PyTorch Linear stores W as (out, in); kernel consumes (in, out).
    # Zero-pad ragged dims so every matmul / store uses full lanes.
    w1t = jnp.pad(jnp.asarray(w1, jnp.float32).T,
                  ((0, 0), (0, H1_PAD - H1))).astype(jnp.bfloat16)        # (784, 512)
    b1r = jnp.pad(jnp.asarray(b1, jnp.float32), (0, H1_PAD - H1)).reshape(1, H1_PAD)
    w2t = jnp.pad(jnp.asarray(w2, jnp.float32).T,
                  ((0, H1_PAD - H1), (0, 0))).astype(jnp.bfloat16)        # (512, 256)
    b2r = jnp.asarray(b2, jnp.float32).reshape(1, H2)
    w3t = jnp.pad(jnp.asarray(w3, jnp.float32).T,
                  ((0, 0), (0, D_OUT_PAD - D_OUT))).astype(jnp.bfloat16)  # (256, 128)
    b3r = jnp.pad(jnp.asarray(b3, jnp.float32), (0, D_OUT_PAD - D_OUT)).reshape(1, D_OUT_PAD)

    const = lambda i: (0, 0)  # weights/biases resident in VMEM across all tiles

    out = pl.pallas_call(
        _mlp_kernel,
        out_shape=jax.ShapeDtypeStruct((n_pad, D_OUT_PAD), jnp.float32),
        grid_spec=pltpu.PrefetchScalarGridSpec(
            num_scalar_prefetch=0,
            grid=(n_pad // tile,),
            in_specs=[
                pl.BlockSpec((tile, D_IN), lambda i: (i, 0)),   # x tile (double-buffered)
                pl.BlockSpec((D_IN, H1_PAD), const),            # W1
                pl.BlockSpec((1, H1_PAD), const),               # b1
                pl.BlockSpec((H1_PAD, H2), const),              # W2
                pl.BlockSpec((1, H2), const),                   # b2
                pl.BlockSpec((H2, D_OUT_PAD), const),           # W3
                pl.BlockSpec((1, D_OUT_PAD), const),            # b3
            ],
            out_specs=pl.BlockSpec((tile, D_OUT_PAD), lambda i: (i, 0)),
        ),
        compiler_params=pltpu.CompilerParams(
            dimension_semantics=("parallel",),   # shard batch tiles across TCs (v7x)
            vmem_limit_bytes=32 << 20,           # ~1.1 MB weights + 2x tile buffers
        ),
    )(x, w1t, b1r, w2t, b2r, w3t, b3r)

    return out[:n, :D_OUT]


def init_params(key):
    """Deterministic init mirroring nn.Linear default (uniform +/- 1/sqrt(fan_in))."""
    def linear(key, fan_in, fan_out):
        kw, kb = jax.random.split(key)
        bound = 1.0 / jnp.sqrt(fan_in)
        w = jax.random.uniform(kw, (fan_out, fan_in), jnp.float32, -bound, bound)
        b = jax.random.uniform(kb, (fan_out,), jnp.float32, -bound, bound)
        return w, b

    k1, k2, k3 = jax.random.split(key, 3)
    w1, b1 = linear(k1, D_IN, H1)
    w2, b2 = linear(k2, H1, H2)
    w3, b3 = linear(k3, H2, D_OUT)
    return (w1, b1, w2, b2, w3, b3)


def _reference(x_nchw, params):
    w1, b1, w2, b2, w3, b3 = params
    x = x_nchw.reshape(x_nchw.shape[0], -1).astype(jnp.float32)
    h1 = jnp.maximum(x @ w1.T + b1, 0.0)
    h2 = jnp.maximum(h1 @ w2.T + b2, 0.0)
    return h2 @ w3.T + b3


if __name__ == "__main__":
    key = jax.random.PRNGKey(0)
    kx, kp = jax.random.split(key)
    # Small MNIST-like batch: (N, C, H, W) = (2, 1, 28, 28)
    x = jax.random.normal(kx, (2, 1, 28, 28), jnp.float32)
    params = init_params(kp)

    out = mlp_forward(x, params)
    out = jax.block_until_ready(out)

    ref = _reference(x, params)
    assert out.shape == (2, 10), out.shape
    # bf16 operands (f32 accumulation) -> loosened tolerance vs f32 reference.
    assert jnp.allclose(out, ref, atol=5e-2, rtol=5e-2), "mismatch vs reference"
    print("KERNEL_OK")
</pallas_src>

<mosaic_0001>
module attributes {stable_mosaic.version = 11 : i64} {
  func.func @_mlp_kernel(%arg0: i32, %arg1: memref<8x784xbf16, #tpu.memory_space<vmem>>, %arg2: memref<784x512xbf16, #tpu.memory_space<vmem>>, %arg3: memref<1x512xf32, #tpu.memory_space<vmem>>, %arg4: memref<512x256xbf16, #tpu.memory_space<vmem>>, %arg5: memref<1x256xf32, #tpu.memory_space<vmem>>, %arg6: memref<256x128xbf16, #tpu.memory_space<vmem>>, %arg7: memref<1x128xf32, #tpu.memory_space<vmem>>, %arg8: memref<8x128xf32, #tpu.memory_space<vmem>>) attributes {dimension_semantics = [#tpu.dimension_semantics<parallel>], iteration_bounds = array<i64: 1>, scalar_prefetch = 0 : i64, scratch_operands = 0 : i64, tpu.core_type = #tpu.core_type<tc>, window_params = [{transform_indices = @transform_0, window_bounds = array<i64: 8, 784>}, {pipeline_mode = #tpu.pipeline_mode<synchronous>, transform_indices = @transform_1, window_bounds = array<i64: 784, 512>}, {pipeline_mode = #tpu.pipeline_mode<synchronous>, transform_indices = @transform_2, window_bounds = array<i64: 1, 512>}, {pipeline_mode = #tpu.pipeline_mode<synchronous>, transform_indices = @transform_3, window_bounds = array<i64: 512, 256>}, {pipeline_mode = #tpu.pipeline_mode<synchronous>, transform_indices = @transform_4, window_bounds = array<i64: 1, 256>}, {pipeline_mode = #tpu.pipeline_mode<synchronous>, transform_indices = @transform_5, window_bounds = array<i64: 256, 128>}, {pipeline_mode = #tpu.pipeline_mode<synchronous>, transform_indices = @transform_6, window_bounds = array<i64: 1, 128>}, {transform_indices = @transform_7, window_bounds = array<i64: 8, 128>}]} {
    %c0 = arith.constant 0 : index
    %c0_0 = arith.constant 0 : index
    %0 = vector.load %arg1[%c0, %c0_0] : memref<8x784xbf16, #tpu.memory_space<vmem>>, vector<8x784xbf16>
    %c0_1 = arith.constant 0 : index
    %c0_2 = arith.constant 0 : index
    %1 = vector.load %arg2[%c0_1, %c0_2] : memref<784x512xbf16, #tpu.memory_space<vmem>>, vector<784x512xbf16>
    %cst = arith.constant dense<0.000000e+00> : vector<8x512xf32>
    %2 = tpu.matmul %0, %1, %cst {dimension_numbers = #tpu.dot_dimension_numbers<[1], [0], [0], [1], [0, 0, 1, 1], [], []>} : vector<8x784xbf16>, vector<784x512xbf16>, vector<8x512xf32> -> vector<8x512xf32>
    %c0_3 = arith.constant 0 : index
    %c0_4 = arith.constant 0 : index
    %3 = vector.load %arg3[%c0_3, %c0_4] : memref<1x512xf32, #tpu.memory_space<vmem>>, vector<1x512xf32>
    %4 = vector.broadcast %3 : vector<1x512xf32> to vector<8x512xf32>
    %5 = arith.addf %2, %4 : vector<8x512xf32>
    %cst_5 = arith.constant 0.000000e+00 : f32
    %6 = vector.broadcast %cst_5 : f32 to vector<8x512xf32>
    %7 = arith.maximumf %5, %6 : vector<8x512xf32>
    %8 = arith.truncf %7 : vector<8x512xf32> to vector<8x512xbf16>
    %c0_6 = arith.constant 0 : index
    %c0_7 = arith.constant 0 : index
    %9 = vector.load %arg4[%c0_6, %c0_7] : memref<512x256xbf16, #tpu.memory_space<vmem>>, vector<512x256xbf16>
    %cst_8 = arith.constant dense<0.000000e+00> : vector<8x256xf32>
    %10 = tpu.matmul %8, %9, %cst_8 {dimension_numbers = #tpu.dot_dimension_numbers<[1], [0], [0], [1], [0, 0, 1, 1], [], []>} : vector<8x512xbf16>, vector<512x256xbf16>, vector<8x256xf32> -> vector<8x256xf32>
    %c0_9 = arith.constant 0 : index
    %c0_10 = arith.constant 0 : index
    %11 = vector.load %arg5[%c0_9, %c0_10] : memref<1x256xf32, #tpu.memory_space<vmem>>, vector<1x256xf32>
    %12 = vector.broadcast %11 : vector<1x256xf32> to vector<8x256xf32>
    %13 = arith.addf %10, %12 : vector<8x256xf32>
    %cst_11 = arith.constant 0.000000e+00 : f32
    %14 = vector.broadcast %cst_11 : f32 to vector<8x256xf32>
    %15 = arith.maximumf %13, %14 : vector<8x256xf32>
    %16 = arith.truncf %15 : vector<8x256xf32> to vector<8x256xbf16>
    %c0_12 = arith.constant 0 : index
    %c0_13 = arith.constant 0 : index
    %17 = vector.load %arg6[%c0_12, %c0_13] : memref<256x128xbf16, #tpu.memory_space<vmem>>, vector<256x128xbf16>
    %cst_14 = arith.constant dense<0.000000e+00> : vector<8x128xf32>
    %18 = tpu.matmul %16, %17, %cst_14 {dimension_numbers = #tpu.dot_dimension_numbers<[1], [0], [0], [1], [0, 0, 1, 1], [], []>} : vector<8x256xbf16>, vector<256x128xbf16>, vector<8x128xf32> -> vector<8x128xf32>
    %c0_15 = arith.constant 0 : index
    %c0_16 = arith.constant 0 : index
    %19 = vector.load %arg7[%c0_15, %c0_16] : memref<1x128xf32, #tpu.memory_space<vmem>>, vector<1x128xf32>
    %20 = vector.broadcast %19 : vector<1x128xf32> to vector<8x128xf32>
    %21 = arith.addf %18, %20 : vector<8x128xf32>
    %c0_17 = arith.constant 0 : index
    %c0_18 = arith.constant 0 : index
    %22 = vector.load %arg8[%c0_17, %c0_18] : memref<8x128xf32, #tpu.memory_space<vmem>>, vector<8x128xf32>
    tpu.vector_store %arg8[%c0_17, %c0_18], %21 {strides = array<i32>} : memref<8x128xf32, #tpu.memory_space<vmem>>, vector<8x128xf32>,
    return
  }
  func.func @transform_0(%arg0: i32) -> (i32, i32) {
    %c0_i32 = arith.constant 0 : i32
    %c0_i32_0 = arith.constant 0 : i32
    return %arg0, %c0_i32 : i32, i32
  }
  func.func @transform_1(%arg0: i32) -> (i32, i32) {
    %c0_i32 = arith.constant 0 : i32
    %c0_i32_0 = arith.constant 0 : i32
    %c0_i32_1 = arith.constant 0 : i32
    return %c0_i32, %c0_i32_0 : i32, i32
  }
  func.func @transform_2(%arg0: i32) -> (i32, i32) {
    %c0_i32 = arith.constant 0 : i32
    %c0_i32_0 = arith.constant 0 : i32
    %c0_i32_1 = arith.constant 0 : i32
    return %c0_i32, %c0_i32_0 : i32, i32
  }
  func.func @transform_3(%arg0: i32) -> (i32, i32) {
    %c0_i32 = arith.constant 0 : i32
    %c0_i32_0 = arith.constant 0 : i32
    %c0_i32_1 = arith.constant 0 : i32
    return %c0_i32, %c0_i32_0 : i32, i32
  }
  func.func @transform_4(%arg0: i32) -> (i32, i32) {
    %c0_i32 = arith.constant 0 : i32
    %c0_i32_0 = arith.constant 0 : i32
    %c0_i32_1 = arith.constant 0 : i32
    return %c0_i32, %c0_i32_0 : i32, i32
  }
  func.func @transform_5(%arg0: i32) -> (i32, i32) {
    %c0_i32 = arith.constant 0 : i32
    %c0_i32_0 = arith.constant 0 : i32
    %c0_i32_1 = arith.constant 0 : i32
    return %c0_i32, %c0_i32_0 : i32, i32
  }
  func.func @transform_6(%arg0: i32) -> (i32, i32) {
    %c0_i32 = arith.constant 0 : i32
    %c0_i32_0 = arith.constant 0 : i32
    %c0_i32_1 = arith.constant 0 : i32
    return %c0_i32, %c0_i32_0 : i32, i32
  }
  func.func @transform_7(%arg0: i32) -> (i32, i32) {
    %c0_i32 = arith.constant 0 : i32
    %c0_i32_0 = arith.constant 0 : i32
    return %arg0, %c0_i32 : i32, i32
  }
}

</mosaic_0001>

<llo_original>
// kernel: mlp_forward.1
$region0: #{mlp_forward.1}
  #allocation0 [shape = 'u32[]', space=smem, size = 0x4, offset = 0x4, fixed_abs, tag = 'smem constant byte address 0x4 - core index']
  #allocation1 [shape = 'u32[144,128]{1,0:T(1,128)}', space=vmem, size = 0x12000, scoped, tag = 'internal scratch']
  %s0 = inlined_call_operand.vmem [shape: bf16[8,784], index: 0, kind: input, shape index: {}]
  %s1 = inlined_call_operand.vmem [shape: bf16[784,512], index: 1, kind: input, shape index: {}]
  %s2 = inlined_call_operand.vmem [shape: f32[1,512], index: 2, kind: input, shape index: {}]
  %s3 = inlined_call_operand.vmem [shape: bf16[512,256], index: 3, kind: input, shape index: {}]
  %s4 = inlined_call_operand.vmem [shape: f32[1,256], index: 4, kind: input, shape index: {}]
  %s5 = inlined_call_operand.vmem [shape: bf16[256,128], index: 5, kind: input, shape index: {}]
  %s6 = inlined_call_operand.vmem [shape: f32[1,128], index: 6, kind: input, shape index: {}]
  %s7 = inlined_call_operand.vmem [shape: f32[8,128], index: 7, kind: output, shape index: {}]
  %s8 = sld [smem:[#allocation0]]
  $region38: #{mlp_forward.1} parent=0
    _
  %s10 = ssub.s32 1, %s8
  %s11 = scalar_select 0, %s10, %s8
  // Predicated region
  $region2: #{mlp_forward.1} parent=0 // pred_check
    _
  $region3: #{mlp_forward.1} parent=0 // pred_check_branch
    %13 = sbr.rel (0) target = $region5
  $region4: #{mlp_forward.1} parent=0 // pred_region
    _
  $region5: #{mlp_forward.1} parent=0 // pred_fallthru
    _
  // Predicated region
  $region6: #{mlp_forward.1} parent=0 // pred_check
    _
  $region7: #{mlp_forward.1} parent=0 // pred_check_branch
    %15 = sbr.rel (0) target = $region9
  $region8: #{mlp_forward.1} parent=0 // pred_region
    _
  $region9: #{mlp_forward.1} parent=0 // pred_fallthru
    _
  // Predicated region
  $region10: #{mlp_forward.1} parent=0 // pred_check
    _
  $region11: #{mlp_forward.1} parent=0 // pred_check_branch
    %17 = sbr.rel (0) target = $region13
  $region12: #{mlp_forward.1} parent=0 // pred_region
    _
  $region13: #{mlp_forward.1} parent=0 // pred_fallthru
    _
  // Predicated region
  $region14: #{mlp_forward.1} parent=0 // pred_check
    _
  $region15: #{mlp_forward.1} parent=0 // pred_check_branch
    %19 = sbr.rel (0) target = $region17
  $region16: #{mlp_forward.1} parent=0 // pred_region
    _
  $region17: #{mlp_forward.1} parent=0 // pred_fallthru
    _
  // Predicated region
  $region18: #{mlp_forward.1} parent=0 // pred_check
    _
  $region19: #{mlp_forward.1} parent=0 // pred_check_branch
    %21 = sbr.rel (0) target = $region21
  $region20: #{mlp_forward.1} parent=0 // pred_region
    _
  $region21: #{mlp_forward.1} parent=0 // pred_fallthru
    _
  // Predicated region
  $region22: #{mlp_forward.1} parent=0 // pred_check
    _
  $region23: #{mlp_forward.1} parent=0 // pred_check_branch
    %23 = sbr.rel (0) target = $region25
  $region24: #{mlp_forward.1} parent=0 // pred_region
    _
  $region25: #{mlp_forward.1} parent=0 // pred_fallthru
    _
  // Predicated region
  $region26: #{mlp_forward.1} parent=0 // pred_check
    _
  $region27: #{mlp_forward.1} parent=0 // pred_check_branch
    %25 = sbr.rel (0) target = $region29
  $region28: #{mlp_forward.1} parent=0 // pred_region
    _
  $region29: #{mlp_forward.1} parent=0 // pred_fallthru
    _
  %v27 = vld [vmem:[%s0] sm:$0xff]
  %v28 = vld [vmem:[%s0 + $0x8] sm:$0xff]
  %v29 = vld [vmem:[%s0 + $0x10] sm:$0xff]
  %v30 = vld [vmem:[%s0 + $0x18] sm:$0xf]
  %v31 = vld [vmem:[%s1] sm:$0xff]
  %v32 = vld [vmem:[%s1 + $0x8] sm:$0xff]
  %v33 = vld [vmem:[%s1 + $0x10] sm:$0xff]
  %v34 = vld [vmem:[%s1 + $0x18] sm:$0xff]
  %v35 = vld [vmem:[%s1 + $0x20] sm:$0xff]
  %v36 = vld [vmem:[%s1 + $0x28] sm:$0xff]
  %v37 = vld [vmem:[%s1 + $0x30] sm:$0xff]
  %v38 = vld [vmem:[%s1 + $0x38] sm:$0xff]
  %v39 = vld [vmem:[%s1 + $0x40] sm:$0xff]
  %v40 = vld [vmem:[%s1 + $0x48] sm:$0xff]
  %v41 = vld [vmem:[%s1 + $0x50] sm:$0xff]
  %v42 = vld [vmem:[%s1 + $0x58] sm:$0xff]
  %v43 = vld [vmem:[%s1 + $0x60] sm:$0xff]
  %v44 = vld [vmem:[%s1 + $0x68] sm:$0xff]
  %v45 = vld [vmem:[%s1 + $0x70] sm:$0xff]
  %v46 = vld [vmem:[%s1 + $0x78] sm:$0xff]
  %v47 = vld [vmem:[%s1 + $0x80] sm:$0xff]
  %v48 = vld [vmem:[%s1 + $0x88] sm:$0xff]
  %v49 = vld [vmem:[%s1 + $0x90] sm:$0xff]
  %v50 = vld [vmem:[%s1 + $0x98] sm:$0xff]
  %v51 = vld [vmem:[%s1 + $0xa0] sm:$0xff]
  %v52 = vld [vmem:[%s1 + $0xa8] sm:$0xff]
  %v53 = vld [vmem:[%s1 + $0xb0] sm:$0xff]
  %v54 = vld [vmem:[%s1 + $0xb8] sm:$0xff]
  %v55 = vld [vmem:[%s1 + $0xc0] sm:$0xff]
  %v56 = vld [vmem:[%s1 + $0xc8] sm:$0xff]
  %v57 = vld [vmem:[%s1 + $0xd0] sm:$0xff]
  %v58 = vld [vmem:[%s1 + $0xd8] sm:$0xff]
  %v59 = vld [vmem:[%s1 + $0xe0] sm:$0xff]
  %v60 = vld [vmem:[%s1 + $0xe8] sm:$0xff]
  %v61 = vld [vmem:[%s1 + $0xf0] sm:$0xff]
  %v62 = vld [vmem:[%s1 + $0xf8] sm:$0xff]
  %v63 = vld [vmem:[%s1 + $0x100] sm:$0xff]
  %v64 = vld [vmem:[%s1 + $0x108] sm:$0xff]
  %v65 = vld [vmem:[%s1 + $0x110] sm:$0xff]
  %v66 = vld [vmem:[%s1 + $0x118] sm:$0xff]
  %v67 = vld [vmem:[%s1 + $0x120] sm:$0xff]
  %v68 = vld [vmem:[%s1 + $0x128] sm:$0xff]
  %v69 = vld [vmem:[%s1 + $0x130] sm:$0xff]
  %v70 = vld [vmem:[%s1 + $0x138] sm:$0xff]
  %v71 = vld [vmem:[%s1 + $0x140] sm:$0xff]
  %v72 = vld [vmem:[%s1 + $0x148] sm:$0xff]
  %v73 = vld [vmem:[%s1 + $0x150] sm:$0xff]
  %v74 = vld [vmem:[%s1 + $0x158] sm:$0xff]
  %v75 = vld [vmem:[%s1 + $0x160] sm:$0xff]
  %v76 = vld [vmem:[%s1 + $0x168] sm:$0xff]
  %v77 = vld [vmem:[%s1 + $0x170] sm:$0xff]
  %v78 = vld [vmem:[%s1 + $0x178] sm:$0xff]
  %v79 = vld [vmem:[%s1 + $0x180] sm:$0xff]
  %v80 = vld [vmem:[%s1 + $0x188] sm:$0xff]
  %v81 = vld [vmem:[%s1 + $0x190] sm:$0xff]
  %v82 = vld [vmem:[%s1 + $0x198] sm:$0xff]
  %v83 = vld [vmem:[%s1 + $0x1a0] sm:$0xff]
  %v84 = vld [vmem:[%s1 + $0x1a8] sm:$0xff]
  %v85 = vld [vmem:[%s1 + $0x1b0] sm:$0xff]
  %v86 = vld [vmem:[%s1 + $0x1b8] sm:$0xff]
  %v87 = vld [vmem:[%s1 + $0x1c0] sm:$0xff]
  %v88 = vld [vmem:[%s1 + $0x1c8] sm:$0xff]
  %v89 = vld [vmem:[%s1 + $0x1d0] sm:$0xff]
  %v90 = vld [vmem:[%s1 + $0x1d8] sm:$0xff]
  %v91 = vld [vmem:[%s1 + $0x1e0] sm:$0xff]
  %v92 = vld [vmem:[%s1 + $0x1e8] sm:$0xff]
  %v93 = vld [vmem:[%s1 + $0x1f0] sm:$0xff]
  %v94 = vld [vmem:[%s1 + $0x1f8] sm:$0xff]
  %v95 = vld [vmem:[%s1 + $0x200] sm:$0xff]
  %v96 = vld [vmem:[%s1 + $0x208] sm:$0xff]
  %v97 = vld [vmem:[%s1 + $0x210] sm:$0xff]
  %v98 = vld [vmem:[%s1 + $0x218] sm:$0xff]
  %v99 = vld [vmem:[%s1 + $0x220] sm:$0xff]
  %v100 = vld [vmem:[%s1 + $0x228] sm:$0xff]
  %v101 = vld [vmem:[%s1 + $0x230] sm:$0xff]
  %v102 = vld [vmem:[%s1 + $0x238] sm:$0xff]
  %v103 = vld [vmem:[%s1 + $0x240] sm:$0xff]
  %v104 = vld [vmem:[%s1 + $0x248] sm:$0xff]
  %v105 = vld [vmem:[%s1 + $0x250] sm:$0xff]
  %v106 = vld [vmem:[%s1 + $0x258] sm:$0xff]
  %v107 = vld [vmem:[%s1 + $0x260] sm:$0xff]
  %v108 = vld [vmem:[%s1 + $0x268] sm:$0xff]
  %v109 = vld [vmem:[%s1 + $0x270] sm:$0xff]
  %v110 = vld [vmem:[%s1 + $0x278] sm:$0xff]
  %v111 = vld [vmem:[%s1 + $0x280] sm:$0xff]
  %v112 = vld [vmem:[%s1 + $0x288] sm:$0xff]
  %v113 = vld [vmem:[%s1 + $0x290] sm:$0xff]
  %v114 = vld [vmem:[%s1 + $0x298] sm:$0xff]
  %v115 = vld [vmem:[%s1 + $0x2a0] sm:$0xff]
  %v116 = vld [vmem:[%s1 + $0x2a8] sm:$0xff]
  %v117 = vld [vmem:[%s1 + $0x2b0] sm:$0xff]
  %v118 = vld [vmem:[%s1 + $0x2b8] sm:$0xff]
  %v119 = vld [vmem:[%s1 + $0x2c0] sm:$0xff]
  %v120 = vld [vmem:[%s1 + $0x2c8] sm:$0xff]
  %v121 = vld [vmem:[%s1 + $0x2d0] sm:$0xff]
  %v122 = vld [vmem:[%s1 + $0x2d8] sm:$0xff]
  %v123 = vld [vmem:[%s1 + $0x2e0] sm:$0xff]
  %v124 = vld [vmem:[%s1 + $0x2e8] sm:$0xff]
  %v125 = vld [vmem:[%s1 + $0x2f0] sm:$0xff]
  %v126 = vld [vmem:[%s1 + $0x2f8] sm:$0xff]
  %v127 = vld [vmem:[%s1 + $0x300] sm:$0xff]
  %v128 = vld [vmem:[%s1 + $0x308] sm:$0xff]
  %v129 = vld [vmem:[%s1 + $0x310] sm:$0xff]
  %v130 = vld [vmem:[%s1 + $0x318] sm:$0xff]
  %v131 = vld [vmem:[%s1 + $0x320] sm:$0xff]
  %v132 = vld [vmem:[%s1 + $0x328] sm:$0xff]
  %v133 = vld [vmem:[%s1 + $0x330] sm:$0xff]
  %v134 = vld [vmem:[%s1 + $0x338] sm:$0xff]
  %v135 = vld [vmem:[%s1 + $0x340] sm:$0xff]
  %v136 = vld [vmem:[%s1 + $0x348] sm:$0xff]
  %v137 = vld [vmem:[%s1 + $0x350] sm:$0xff]
  %v138 = vld [vmem:[%s1 + $0x358] sm:$0xff]
  %v139 = vld [vmem:[%s1 + $0x360] sm:$0xff]
  %v140 = vld [vmem:[%s1 + $0x368] sm:$0xff]
  %v141 = vld [vmem:[%s1 + $0x370] sm:$0xff]
  %v142 = vld [vmem:[%s1 + $0x378] sm:$0xff]
  %v143 = vld [vmem:[%s1 + $0x380] sm:$0xff]
  %v144 = vld [vmem:[%s1 + $0x388] sm:$0xff]
  %v145 = vld [vmem:[%s1 + $0x390] sm:$0xff]
  %v146 = vld [vmem:[%s1 + $0x398] sm:$0xff]
  %v147 = vld [vmem:[%s1 + $0x3a0] sm:$0xff]
  %v148 = vld [vmem:[%s1 + $0x3a8] sm:$0xff]
  %v149 = vld [vmem:[%s1 + $0x3b0] sm:$0xff]
  %v150 = vld [vmem:[%s1 + $0x3b8] sm:$0xff]
  %v151 = vld [vmem:[%s1 + $0x3c0] sm:$0xff]
  %v152 = vld [vmem:[%s1 + $0x3c8] sm:$0xff]
  %v153 = vld [vmem:[%s1 + $0x3d0] sm:$0xff]
  %v154 = vld [vmem:[%s1 + $0x3d8] sm:$0xff]
  %v155 = vld [vmem:[%s1 + $0x3e0] sm:$0xff]
  %v156 = vld [vmem:[%s1 + $0x3e8] sm:$0xff]
  %v157 = vld [vmem:[%s1 + $0x3f0] sm:$0xff]
  %v158 = vld [vmem:[%s1 + $0x3f8] sm:$0xff]
  %v159 = vld [vmem:[%s1 + $0x400] sm:$0xff]
  %v160 = vld [vmem:[%s1 + $0x408] sm:$0xff]
  %v161 = vld [vmem:[%s1 + $0x410] sm:$0xff]
  %v162 = vld [vmem:[%s1 + $0x418] sm:$0xff]
  %v163 = vld [vmem:[%s1 + $0x420] sm:$0xff]
  %v164 = vld [vmem:[%s1 + $0x428] sm:$0xff]
  %v165 = vld [vmem:[%s1 + $0x430] sm:$0xff]
  %v166 = vld [vmem:[%s1 + $0x438] sm:$0xff]
  %v167 = vld [vmem:[%s1 + $0x440] sm:$0xff]
  %v168 = vld [vmem:[%s1 + $0x448] sm:$0xff]
  %v169 = vld [vmem:[%s1 + $0x450] sm:$0xff]
  %v170 = vld [vmem:[%s1 + $0x458] sm:$0xff]
  %v171 = vld [vmem:[%s1 + $0x460] sm:$0xff]
  %v172 = vld [vmem:[%s1 + $0x468] sm:$0xff]
  %v173 = vld [vmem:[%s1 + $0x470] sm:$0xff]
  %v174 = vld [vmem:[%s1 + $0x478] sm:$0xff]
  %v175 = vld [vmem:[%s1 + $0x480] sm:$0xff]
  %v176 = vld [vmem:[%s1 + $0x488] sm:$0xff]
  %v177 = vld [vmem:[%s1 + $0x490] sm:$0xff]
  %v178 = vld [vmem:[%s1 + $0x498] sm:$0xff]
  %v179 = vld [vmem:[%s1 + $0x4a0] sm:$0xff]
  %v180 = vld [vmem:[%s1 + $0x4a8] sm:$0xff]
  %v181 = vld [vmem:[%s1 + $0x4b0] sm:$0xff]
  %v182 = vld [vmem:[%s1 + $0x4b8] sm:$0xff]
  %v183 = vld [vmem:[%s1 + $0x4c0] sm:$0xff]
  %v184 = vld [vmem:[%s1 + $0x4c8] sm:$0xff]
  %v185 = vld [vmem:[%s1 + $0x4d0] sm:$0xff]
  %v186 = vld [vmem:[%s1 + $0x4d8] sm:$0xff]
  %v187 = vld [vmem:[%s1 + $0x4e0] sm:$0xff]
  %v188 = vld [vmem:[%s1 + $0x4e8] sm:$0xff]
  %v189 = vld [vmem:[%s1 + $0x4f0] sm:$0xff]
  %v190 = vld [vmem:[%s1 + $0x4f8] sm:$0xff]
  %v191 = vld [vmem:[%s1 + $0x500] sm:$0xff]
  %v192 = vld [vmem:[%s1 + $0x508] sm:$0xff]
  %v193 = vld [vmem:[%s1 + $0x510] sm:$0xff]
  %v194 = vld [vmem:[%s1 + $0x518] sm:$0xff]
  %v195 = vld [vmem:[%s1 + $0x520] sm:$0xff]
  %v196 = vld [vmem:[%s1 + $0x528] sm:$0xff]
  %v197 = vld [vmem:[%s1 + $0x530] sm:$0xff]
  %v198 = vld [vmem:[%s1 + $0x538] sm:$0xff]
  %v199 = vld [vmem:[%s1 + $0x540] sm:$0xff]
  %v200 = vld [vmem:[%s1 + $0x548] sm:$0xff]
  %v201 = vld [vmem:[%s1 + $0x550] sm:$0xff]
  %v202 = vld [vmem:[%s1 + $0x558] sm:$0xff]
  %v203 = vld [vmem:[%s1 + $0x560] sm:$0xff]
  %v204 = vld [vmem:[%s1 + $0x568] sm:$0xff]
  %v205 = vld [vmem:[%s1 + $0x570] sm:$0xff]
  %v206 = vld [vmem:[%s1 + $0x578] sm:$0xff]
  %v207 = vld [vmem:[%s1 + $0x580] sm:$0xff]
  %v208 = vld [vmem:[%s1 + $0x588] sm:$0xff]
  %v209 = vld [vmem:[%s1 + $0x590] sm:$0xff]
  %v210 = vld [vmem:[%s1 + $0x598] sm:$0xff]
  %v211 = vld [vmem:[%s1 + $0x5a0] sm:$0xff]
  %v212 = vld [vmem:[%s1 + $0x5a8] sm:$0xff]
  %v213 = vld [vmem:[%s1 + $0x5b0] sm:$0xff]
  %v214 = vld [vmem:[%s1 + $0x5b8] sm:$0xff]
  %v215 = vld [vmem:[%s1 + $0x5c0] sm:$0xff]
  %v216 = vld [vmem:[%s1 + $0x5c8] sm:$0xff]
  %v217 = vld [vmem:[%s1 + $0x5d0] sm:$0xff]
  %v218 = vld [vmem:[%s1 + $0x5d8] sm:$0xff]
  %v219 = vld [vmem:[%s1 + $0x5e0] sm:$0xff]
  %v220 = vld [vmem:[%s1 + $0x5e8] sm:$0xff]
  %v221 = vld [vmem:[%s1 + $0x5f0] sm:$0xff]
  %v222 = vld [vmem:[%s1 + $0x5f8] sm:$0xff]
  %v223 = vld [vmem:[%s1 + $0x600] sm:$0xff]
  %v224 = vld [vmem:[%s1 + $0x608] sm:$0xff]
  %v225 = vld [vmem:[%s1 + $0x610] sm:$0xff]
  %v226 = vld [vmem:[%s1 + $0x618] sm:$0xff]
  %v227 = vld [vmem:[%s2] sm:$0xf]
  %v229 = vlaneseq
  %v230 = vshrl.u32 %v229, 7
  %v231 = vsub.s32 0, %v230
  %v232 = vrot.slane %v227, %v231
  %v233 = vlaneseq
  %v234 = vshrl.u32 %v233, 7
  %v235 = vsub.s32 1, %v234
  %v236 = vrot.slane %v227, %v235
  %v237 = vlaneseq
  %v238 = vshrl.u32 %v237, 7
  %v239 = vsub.s32 2, %v238
  %v240 = vrot.slane %v227, %v239
  %v241 = vlaneseq
  %v242 = vshrl.u32 %v241, 7
  %v243 = vsub.s32 3, %v242
  %v244 = vrot.slane %v227, %v243
  %v253 = vunpack.c.l.b16 %v27
  %v254 = vunpack.c.h.b16 %v27
  %v255 = vunpack.c.l.b16 %v28
  %v256 = vunpack.c.h.b16 %v28
  %v257 = vunpack.c.l.b16 %v29
  %v258 = vunpack.c.h.b16 %v29
  %v259 = vunpack.c.l.b16 %v30
  %v260 = vpack.c.b16 %v253, %v253
  %v261 = vpack.c.b16 %v254, %v254
  %v262 = vpack.c.b16 %v255, %v255
  %v263 = vpack.c.b16 %v256, %v256
  %v264 = vpack.c.b16 %v257, %v257
  %v265 = vpack.c.b16 %v258, %v258
  %v266 = vpack.c.b16 %v259, %v259
  %v469 = vunpack.c.l.b16 %v31
  %v470 = vunpack.c.h.b16 %v31
  %v471 = vunpack.c.l.b16 %v32
  %v472 = vunpack.c.h.b16 %v32
  %v473 = vunpack.c.l.b16 %v33
  %v474 = vunpack.c.h.b16 %v33
  %v475 = vunpack.c.l.b16 %v34
  %v476 = vunpack.c.h.b16 %v34
  %v477 = vunpack.c.l.b16 %v35
  %v478 = vunpack.c.h.b16 %v35
  %v479 = vunpack.c.l.b16 %v36
  %v480 = vunpack.c.h.b16 %v36
  %v481 = vunpack.c.l.b16 %v37
  %v482 = vunpack.c.h.b16 %v37
  %v483 = vunpack.c.l.b16 %v38
  %v484 = vunpack.c.h.b16 %v38
  %v485 = vunpack.c.l.b16 %v39
  %v486 = vunpack.c.h.b16 %v39
  %v487 = vunpack.c.l.b16 %v40
  %v488 = vunpack.c.h.b16 %v40
  %v489 = vunpack.c.l.b16 %v41
  %v490 = vunpack.c.h.b16 %v41
  %v491 = vunpack.c.l.b16 %v42
  %v492 = vunpack.c.h.b16 %v42
  %v493 = vunpack.c.l.b16 %v43
  %v494 = vunpack.c.h.b16 %v43
  %v495 = vunpack.c.l.b16 %v44
  %v496 = vunpack.c.h.b16 %v44
  %v497 = vunpack.c.l.b16 %v45
  %v498 = vunpack.c.h.b16 %v45
  %v499 = vunpack.c.l.b16 %v46
  %v500 = vunpack.c.h.b16 %v46
  %v501 = vunpack.c.l.b16 %v47
  %v502 = vunpack.c.h.b16 %v47
  %v503 = vunpack.c.l.b16 %v48
  %v504 = vunpack.c.h.b16 %v48
  %v505 = vunpack.c.l.b16 %v49
  %v506 = vunpack.c.h.b16 %v49
  %v507 = vunpack.c.l.b16 %v50
  %v508 = vunpack.c.h.b16 %v50
  %v509 = vunpack.c.l.b16 %v51
  %v510 = vunpack.c.h.b16 %v51
  %v511 = vunpack.c.l.b16 %v52
  %v512 = vunpack.c.h.b16 %v52
  %v513 = vunpack.c.l.b16 %v53
  %v514 = vunpack.c.h.b16 %v53
  %v515 = vunpack.c.l.b16 %v54
  %v516 = vunpack.c.h.b16 %v54
  %v517 = vunpack.c.l.b16 %v55
  %v518 = vunpack.c.h.b16 %v55
  %v519 = vunpack.c.l.b16 %v56
  %v520 = vunpack.c.h.b16 %v56
  %v521 = vunpack.c.l.b16 %v57
  %v522 = vunpack.c.h.b16 %v57
  %v523 = vunpack.c.l.b16 %v58
  %v524 = vunpack.c.h.b16 %v58
  %v525 = vunpack.c.l.b16 %v59
  %v526 = vunpack.c.h.b16 %v59
  %v527 = vunpack.c.l.b16 %v60
  %v528 = vunpack.c.h.b16 %v60
  %v529 = vunpack.c.l.b16 %v61
  %v530 = vunpack.c.h.b16 %v61
  %v531 = vunpack.c.l.b16 %v62
  %v532 = vunpack.c.h.b16 %v62
  %v533 = vunpack.c.l.b16 %v63
  %v534 = vunpack.c.h.b16 %v63
  %v535 = vunpack.c.l.b16 %v64
  %v536 = vunpack.c.h.b16 %v64
  %v537 = vunpack.c.l.b16 %v65
  %v538 = vunpack.c.h.b16 %v65
  %v539 = vunpack.c.l.b16 %v66
  %v540 = vunpack.c.h.b16 %v66
  %v541 = vunpack.c.l.b16 %v67
  %v542 = vunpack.c.h.b16 %v67
  %v543 = vunpack.c.l.b16 %v68
  %v544 = vunpack.c.h.b16 %v68
  %v545 = vunpack.c.l.b16 %v69
  %v546 = vunpack.c.h.b16 %v69
  %v547 = vunpack.c.l.b16 %v70
  %v548 = vunpack.c.h.b16 %v70
  %v549 = vunpack.c.l.b16 %v71
  %v550 = vunpack.c.h.b16 %v71
  %v551 = vunpack.c.l.b16 %v72
  %v552 = vunpack.c.h.b16 %v72
  %v553 = vunpack.c.l.b16 %v73
  %v554 = vunpack.c.h.b16 %v73
  %v555 = vunpack.c.l.b16 %v74
  %v556 = vunpack.c.h.b16 %v74
  %v557 = vunpack.c.l.b16 %v75
  %v558 = vunpack.c.h.b16 %v75
  %v559 = vunpack.c.l.b16 %v76
  %v560 = vunpack.c.h.b16 %v76
  %v561 = vunpack.c.l.b16 %v77
  %v562 = vunpack.c.h.b16 %v77
  %v563 = vunpack.c.l.b16 %v78
  %v564 = vunpack.c.h.b16 %v78
  %v565 = vunpack.c.l.b16 %v79
  %v566 = vunpack.c.h.b16 %v79
  %v567 = vunpack.c.l.b16 %v80
  %v568 = vunpack.c.h.b16 %v80
  %v569 = vunpack.c.l.b16 %v81
  %v570 = vunpack.c.h.b16 %v81
  %v571 = vunpack.c.l.b16 %v82
  %v572 = vunpack.c.h.b16 %v82
  %v573 = vunpack.c.l.b16 %v83
  %v574 = vunpack.c.h.b16 %v83
  %v575 = vunpack.c.l.b16 %v84
  %v576 = vunpack.c.h.b16 %v84
  %v577 = vunpack.c.l.b16 %v85
  %v578 = vunpack.c.h.b16 %v85
  %v579 = vunpack.c.l.b16 %v86
  %v580 = vunpack.c.h.b16 %v86
  %v581 = vunpack.c.l.b16 %v87
  %v582 = vunpack.c.h.b16 %v87
  %v583 = vunpack.c.l.b16 %v88
  %v584 = vunpack.c.h.b16 %v88
  %v585 = vunpack.c.l.b16 %v89
  %v586 = vunpack.c.h.b16 %v89
  %v587 = vunpack.c.l.b16 %v90
  %v588 = vunpack.c.h.b16 %v90
  %v589 = vunpack.c.l.b16 %v91
  %v590 = vunpack.c.h.b16 %v91
  %v591 = vunpack.c.l.b16 %v92
  %v592 = vunpack.c.h.b16 %v92
  %v593 = vunpack.c.l.b16 %v93
  %v594 = vunpack.c.h.b16 %v93
  %v595 = vunpack.c.l.b16 %v94
  %v596 = vunpack.c.h.b16 %v94
  %v597 = vunpack.c.l.b16 %v95
  %v598 = vunpack.c.h.b16 %v95
  %v599 = vunpack.c.l.b16 %v96
  %v600 = vunpack.c.h.b16 %v96
  %v601 = vunpack.c.l.b16 %v97
  %v602 = vunpack.c.h.b16 %v97
  %v603 = vunpack.c.l.b16 %v98
  %v604 = vunpack.c.h.b16 %v98
  %v605 = vunpack.c.l.b16 %v99
  %v606 = vunpack.c.h.b16 %v99
  %v607 = vunpack.c.l.b16 %v100
  %v608 = vunpack.c.h.b16 %v100
  %v609 = vunpack.c.l.b16 %v101
  %v610 = vunpack.c.h.b16 %v101
  %v611 = vunpack.c.l.b16 %v102
  %v612 = vunpack.c.h.b16 %v102
  %v613 = vunpack.c.l.b16 %v103
  %v614 = vunpack.c.h.b16 %v103
  %v615 = vunpack.c.l.b16 %v104
  %v616 = vunpack.c.h.b16 %v104
  %v617 = vunpack.c.l.b16 %v105
  %v618 = vunpack.c.h.b16 %v105
  %v619 = vunpack.c.l.b16 %v106
  %v620 = vunpack.c.h.b16 %v106
  %v621 = vunpack.c.l.b16 %v107
  %v622 = vunpack.c.h.b16 %v107
  %v623 = vunpack.c.l.b16 %v108
  %v624 = vunpack.c.h.b16 %v108
  %v625 = vunpack.c.l.b16 %v109
  %v626 = vunpack.c.h.b16 %v109
  %v627 = vunpack.c.l.b16 %v110
  %v628 = vunpack.c.h.b16 %v110
  %v629 = vunpack.c.l.b16 %v111
  %v630 = vunpack.c.h.b16 %v111
  %v631 = vunpack.c.l.b16 %v112
  %v632 = vunpack.c.h.b16 %v112
  %v633 = vunpack.c.l.b16 %v113
  %v634 = vunpack.c.h.b16 %v113
  %v635 = vunpack.c.l.b16 %v114
  %v636 = vunpack.c.h.b16 %v114
  %v637 = vunpack.c.l.b16 %v115
  %v638 = vunpack.c.h.b16 %v115
  %v639 = vunpack.c.l.b16 %v116
  %v640 = vunpack.c.h.b16 %v116
  %v641 = vunpack.c.l.b16 %v117
  %v642 = vunpack.c.h.b16 %v117
  %v643 = vunpack.c.l.b16 %v118
  %v644 = vunpack.c.h.b16 %v118
  %v645 = vunpack.c.l.b16 %v119
  %v646 = vunpack.c.h.b16 %v119
  %v647 = vunpack.c.l.b16 %v120
  %v648 = vunpack.c.h.b16 %v120
  %v649 = vunpack.c.l.b16 %v121
  %v650 = vunpack.c.h.b16 %v121
  %v651 = vunpack.c.l.b16 %v122
  %v652 = vunpack.c.h.b16 %v122
  %v653 = vunpack.c.l.b16 %v123
  %v654 = vunpack.c.h.b16 %v123
  %v655 = vunpack.c.l.b16 %v124
  %v656 = vunpack.c.h.b16 %v124
  %v657 = vunpack.c.l.b16 %v125
  %v658 = vunpack.c.h.b16 %v125
  %v659 = vunpack.c.l.b16 %v126
  %v660 = vunpack.c.h.b16 %v126
  %v661 = vunpack.c.l.b16 %v127
  %v662 = vunpack.c.h.b16 %v127
  %v663 = vunpack.c.l.b16 %v128
  %v664 = vunpack.c.h.b16 %v128
  %v665 = vunpack.c.l.b16 %v129
  %v666 = vunpack.c.h.b16 %v129
  %v667 = vunpack.c.l.b16 %v130
  %v668 = vunpack.c.h.b16 %v130
  %v669 = vunpack.c.l.b16 %v131
  %v670 = vunpack.c.h.b16 %v131
  %v671 = vunpack.c.l.b16 %v132
  %v672 = vunpack.c.h.b16 %v132
  %v673 = vunpack.c.l.b16 %v133
  %v674 = vunpack.c.h.b16 %v133
  %v675 = vunpack.c.l.b16 %v134
  %v676 = vunpack.c.h.b16 %v134
  %v677 = vunpack.c.l.b16 %v135
  %v678 = vunpack.c.h.b16 %v135
  %v679 = vunpack.c.l.b16 %v136
  %v680 = vunpack.c.h.b16 %v136
  %v681 = vunpack.c.l.b16 %v137
  %v682 = vunpack.c.h.b16 %v137
  %v683 = vunpack.c.l.b16 %v138
  %v684 = vunpack.c.h.b16 %v138
  %v685 = vunpack.c.l.b16 %v139
  %v686 = vunpack.c.h.b16 %v139
  %v687 = vunpack.c.l.b16 %v140
  %v688 = vunpack.c.h.b16 %v140
  %v689 = vunpack.c.l.b16 %v141
  %v690 = vunpack.c.h.b16 %v141
  %v691 = vunpack.c.l.b16 %v142
  %v692 = vunpack.c.h.b16 %v142
  %v693 = vunpack.c.l.b16 %v143
  %v694 = vunpack.c.h.b16 %v143
  %v695 = vunpack.c.l.b16 %v144
  %v696 = vunpack.c.h.b16 %v144
  %v697 = vunpack.c.l.b16 %v145
  %v698 = vunpack.c.h.b16 %v145
  %v699 = vunpack.c.l.b16 %v146
  %v700 = vunpack.c.h.b16 %v146
  %v701 = vunpack.c.l.b16 %v147
  %v702 = vunpack.c.h.b16 %v147
  %v703 = vunpack.c.l.b16 %v148
  %v704 = vunpack.c.h.b16 %v148
  %v705 = vunpack.c.l.b16 %v149
  %v706 = vunpack.c.h.b16 %v149
  %v707 = vunpack.c.l.b16 %v150
  %v708 = vunpack.c.h.b16 %v150
  %v709 = vunpack.c.l.b16 %v151
  %v710 = vunpack.c.h.b16 %v151
  %v711 = vunpack.c.l.b16 %v152
  %v712 = vunpack.c.h.b16 %v152
  %v713 = vunpack.c.l.b16 %v153
  %v714 = vunpack.c.h.b16 %v153
  %v715 = vunpack.c.l.b16 %v154
  %v716 = vunpack.c.h.b16 %v154
  %v717 = vunpack.c.l.b16 %v155
  %v718 = vunpack.c.h.b16 %v155
  %v719 = vunpack.c.l.b16 %v156
  %v720 = vunpack.c.h.b16 %v156
  %v721 = vunpack.c.l.b16 %v157
  %v722 = vunpack.c.h.b16 %v157
  %v723 = vunpack.c.l.b16 %v158
  %v724 = vunpack.c.h.b16 %v158
  %v725 = vunpack.c.l.b16 %v159
  %v726 = vunpack.c.h.b16 %v159
  %v727 = vunpack.c.l.b16 %v160
  %v728 = vunpack.c.h.b16 %v160
  %v729 = vunpack.c.l.b16 %v161
  %v730 = vunpack.c.h.b16 %v161
  %v731 = vunpack.c.l.b16 %v162
  %v732 = vunpack.c.h.b16 %v162
  %v733 = vunpack.c.l.b16 %v163
  %v734 = vunpack.c.h.b16 %v163
  %v735 = vunpack.c.l.b16 %v164
  %v736 = vunpack.c.h.b16 %v164
  %v737 = vunpack.c.l.b16 %v165
  %v738 = vunpack.c.h.b16 %v165
  %v739 = vunpack.c.l.b16 %v166
  %v740 = vunpack.c.h.b16 %v166
  %v741 = vunpack.c.l.b16 %v167
  %v742 = vunpack.c.h.b16 %v167
  %v743 = vunpack.c.l.b16 %v168
  %v744 = vunpack.c.h.b16 %v168
  %v745 = vunpack.c.l.b16 %v169
  %v746 = vunpack.c.h.b16 %v169
  %v747 = vunpack.c.l.b16 %v170
  %v748 = vunpack.c.h.b16 %v170
  %v749 = vunpack.c.l.b16 %v171
  %v750 = vunpack.c.h.b16 %v171
  %v751 = vunpack.c.l.b16 %v172
  %v752 = vunpack.c.h.b16 %v172
  %v753 = vunpack.c.l.b16 %v173
  %v754 = vunpack.c.h.b16 %v173
  %v755 = vunpack.c.l.b16 %v174
  %v756 = vunpack.c.h.b16 %v174
  %v757 = vunpack.c.l.b16 %v175
  %v758 = vunpack.c.h.b16 %v175
  %v759 = vunpack.c.l.b16 %v176
  %v760 = vunpack.c.h.b16 %v176
  %v761 = vunpack.c.l.b16 %v177
  %v762 = vunpack.c.h.b16 %v177
  %v763 = vunpack.c.l.b16 %v178
  %v764 = vunpack.c.h.b16 %v178
  %v765 = vunpack.c.l.b16 %v179
  %v766 = vunpack.c.h.b16 %v179
  %v767 = vunpack.c.l.b16 %v180
  %v768 = vunpack.c.h.b16 %v180
  %v769 = vunpack.c.l.b16 %v181
  %v770 = vunpack.c.h.b16 %v181
  %v771 = vunpack.c.l.b16 %v182
  %v772 = vunpack.c.h.b16 %v182
  %v773 = vunpack.c.l.b16 %v183
  %v774 = vunpack.c.h.b16 %v183
  %v775 = vunpack.c.l.b16 %v184
  %v776 = vunpack.c.h.b16 %v184
  %v777 = vunpack.c.l.b16 %v185
  %v778 = vunpack.c.h.b16 %v185
  %v779 = vunpack.c.l.b16 %v186
  %v780 = vunpack.c.h.b16 %v186
  %v781 = vunpack.c.l.b16 %v187
  %v782 = vunpack.c.h.b16 %v187
  %v783 = vunpack.c.l.b16 %v188
  %v784 = vunpack.c.h.b16 %v188
  %v785 = vunpack.c.l.b16 %v189
  %v786 = vunpack.c.h.b16 %v189
  %v787 = vunpack.c.l.b16 %v190
  %v788 = vunpack.c.h.b16 %v190
  %v789 = vunpack.c.l.b16 %v191
  %v790 = vunpack.c.h.b16 %v191
  %v791 = vunpack.c.l.b16 %v192
  %v792 = vunpack.c.h.b16 %v192
  %v793 = vunpack.c.l.b16 %v193
  %v794 = vunpack.c.h.b16 %v193
  %v795 = vunpack.c.l.b16 %v194
  %v796 = vunpack.c.h.b16 %v194
  %v797 = vunpack.c.l.b16 %v195
  %v798 = vunpack.c.h.b16 %v195
  %v799 = vunpack.c.l.b16 %v196
  %v800 = vunpack.c.h.b16 %v196
  %v801 = vunpack.c.l.b16 %v197
  %v802 = vunpack.c.h.b16 %v197
  %v803 = vunpack.c.l.b16 %v198
  %v804 = vunpack.c.h.b16 %v198
  %v805 = vunpack.c.l.b16 %v199
  %v806 = vunpack.c.h.b16 %v199
  %v807 = vunpack.c.l.b16 %v200
  %v808 = vunpack.c.h.b16 %v200
  %v809 = vunpack.c.l.b16 %v201
  %v810 = vunpack.c.h.b16 %v201
  %v811 = vunpack.c.l.b16 %v202
  %v812 = vunpack.c.h.b16 %v202
  %v813 = vunpack.c.l.b16 %v203
  %v814 = vunpack.c.h.b16 %v203
  %v815 = vunpack.c.l.b16 %v204
  %v816 = vunpack.c.h.b16 %v204
  %v817 = vunpack.c.l.b16 %v205
  %v818 = vunpack.c.h.b16 %v205
  %v819 = vunpack.c.l.b16 %v206
  %v820 = vunpack.c.h.b16 %v206
  %v821 = vunpack.c.l.b16 %v207
  %v822 = vunpack.c.h.b16 %v207
  %v823 = vunpack.c.l.b16 %v208
  %v824 = vunpack.c.h.b16 %v208
  %v825 = vunpack.c.l.b16 %v209
  %v826 = vunpack.c.h.b16 %v209
  %v827 = vunpack.c.l.b16 %v210
  %v828 = vunpack.c.h.b16 %v210
  %v829 = vunpack.c.l.b16 %v211
  %v830 = vunpack.c.h.b16 %v211
  %v831 = vunpack.c.l.b16 %v212
  %v832 = vunpack.c.h.b16 %v212
  %v833 = vunpack.c.l.b16 %v213
  %v834 = vunpack.c.h.b16 %v213
  %v835 = vunpack.c.l.b16 %v214
  %v836 = vunpack.c.h.b16 %v214
  %v837 = vunpack.c.l.b16 %v215
  %v838 = vunpack.c.h.b16 %v215
  %v839 = vunpack.c.l.b16 %v216
  %v840 = vunpack.c.h.b16 %v216
  %v841 = vunpack.c.l.b16 %v217
  %v842 = vunpack.c.h.b16 %v217
  %v843 = vunpack.c.l.b16 %v218
  %v844 = vunpack.c.h.b16 %v218
  %v845 = vunpack.c.l.b16 %v219
  %v846 = vunpack.c.h.b16 %v219
  %v847 = vunpack.c.l.b16 %v220
  %v848 = vunpack.c.h.b16 %v220
  %v849 = vunpack.c.l.b16 %v221
  %v850 = vunpack.c.h.b16 %v221
  %v851 = vunpack.c.l.b16 %v222
  %v852 = vunpack.c.h.b16 %v222
  %v853 = vunpack.c.l.b16 %v223
  %v854 = vunpack.c.h.b16 %v223
  %v855 = vunpack.c.l.b16 %v224
  %v856 = vunpack.c.h.b16 %v224
  %v857 = vunpack.c.l.b16 %v225
  %v858 = vunpack.c.h.b16 %v225
  %v859 = vunpack.c.l.b16 %v226
  %v860 = vunpack.c.h.b16 %v226
  %v861 = vpack.c.b16 %v473, %v469
  %v862 = vpack.c.b16 %v474, %v470
  %v863 = vpack.c.b16 %v475, %v471
  %v864 = vpack.c.b16 %v476, %v472
  %v865 = vpack.c.b16 %v481, %v477
  %v866 = vpack.c.b16 %v482, %v478
  %v867 = vpack.c.b16 %v483, %v479
  %v868 = vpack.c.b16 %v484, %v480
  %v869 = vpack.c.b16 %v489, %v485
  %v870 = vpack.c.b16 %v490, %v486
  %v871 = vpack.c.b16 %v491, %v487
  %v872 = vpack.c.b16 %v492, %v488
  %v873 = vpack.c.b16 %v497, %v493
  %v874 = vpack.c.b16 %v498, %v494
  %v875 = vpack.c.b16 %v499, %v495
  %v876 = vpack.c.b16 %v500, %v496
  %v877 = vpack.c.b16 %v505, %v501
  %v878 = vpack.c.b16 %v506, %v502
  %v879 = vpack.c.b16 %v507, %v503
  %v880 = vpack.c.b16 %v508, %v504
  %v881 = vpack.c.b16 %v513, %v509
  %v882 = vpack.c.b16 %v514, %v510
  %v883 = vpack.c.b16 %v515, %v511
  %v884 = vpack.c.b16 %v516, %v512
  %v885 = vpack.c.b16 %v521, %v517
  %v886 = vpack.c.b16 %v522, %v518
  %v887 = vpack.c.b16 %v523, %v519
  %v888 = vpack.c.b16 %v524, %v520
  %v889 = vpack.c.b16 %v529, %v525
  %v890 = vpack.c.b16 %v530, %v526
  %v891 = vpack.c.b16 %v531, %v527
  %v892 = vpack.c.b16 %v532, %v528
  %v893 = vpack.c.b16 %v537, %v533
  %v894 = vpack.c.b16 %v538, %v534
  %v895 = vpack.c.b16 %v539, %v535
  %v896 = vpack.c.b16 %v540, %v536
  %v897 = vpack.c.b16 %v545, %v541
  %v898 = vpack.c.b16 %v546, %v542
  %v899 = vpack.c.b16 %v547, %v543
  %v900 = vpack.c.b16 %v548, %v544
  %v901 = vpack.c.b16 %v553, %v549
  %v902 = vpack.c.b16 %v554, %v550
  %v903 = vpack.c.b16 %v555, %v551
  %v904 = vpack.c.b16 %v556, %v552
  %v905 = vpack.c.b16 %v561, %v557
  %v906 = vpack.c.b16 %v562, %v558
  %v907 = vpack.c.b16 %v563, %v559
  %v908 = vpack.c.b16 %v564, %v560
  %v909 = vpack.c.b16 %v569, %v565
  %v910 = vpack.c.b16 %v570, %v566
  %v911 = vpack.c.b16 %v571, %v567
  %v912 = vpack.c.b16 %v572, %v568
  %v913 = vpack.c.b16 %v577, %v573
  %v914 = vpack.c.b16 %v578, %v574
  %v915 = vpack.c.b16 %v579, %v575
  %v916 = vpack.c.b16 %v580, %v576
  %v917 = vpack.c.b16 %v585, %v581
  %v918 = vpack.c.b16 %v586, %v582
  %v919 = vpack.c.b16 %v587, %v583
  %v920 = vpack.c.b16 %v588, %v584
  %v921 = vpack.c.b16 %v593, %v589
  %v922 = vpack.c.b16 %v594, %v590
  %v923 = vpack.c.b16 %v595, %v591
  %v924 = vpack.c.b16 %v596, %v592
  %v925 = vpack.c.b16 %v601, %v597
  %v926 = vpack.c.b16 %v602, %v598
  %v927 = vpack.c.b16 %v603, %v599
  %v928 = vpack.c.b16 %v604, %v600
  %v929 = vpack.c.b16 %v609, %v605
  %v930 = vpack.c.b16 %v610, %v606
  %v931 = vpack.c.b16 %v611, %v607
  %v932 = vpack.c.b16 %v612, %v608
  %v933 = vpack.c.b16 %v617, %v613
  %v934 = vpack.c.b16 %v618, %v614
  %v935 = vpack.c.b16 %v619, %v615
  %v936 = vpack.c.b16 %v620, %v616
  %v937 = vpack.c.b16 %v625, %v621
  %v938 = vpack.c.b16 %v626, %v622
  %v939 = vpack.c.b16 %v627, %v623
  %v940 = vpack.c.b16 %v628, %v624
  %v941 = vpack.c.b16 %v633, %v629
  %v942 = vpack.c.b16 %v634, %v630
  %v943 = vpack.c.b16 %v635, %v631
  %v944 = vpack.c.b16 %v636, %v632
  %v945 = vpack.c.b16 %v641, %v637
  %v946 = vpack.c.b16 %v642, %v638
  %v947 = vpack.c.b16 %v643, %v639
  %v948 = vpack.c.b16 %v644, %v640
  %v949 = vpack.c.b16 %v649, %v645
  %v950 = vpack.c.b16 %v650, %v646
  %v951 = vpack.c.b16 %v651, %v647
  %v952 = vpack.c.b16 %v652, %v648
  %v953 = vpack.c.b16 %v657, %v653
  %v954 = vpack.c.b16 %v658, %v654
  %v955 = vpack.c.b16 %v659, %v655
  %v956 = vpack.c.b16 %v660, %v656
  %v957 = vpack.c.b16 %v665, %v661
  %v958 = vpack.c.b16 %v666, %v662
  %v959 = vpack.c.b16 %v667, %v663
  %v960 = vpack.c.b16 %v668, %v664
  %v961 = vpack.c.b16 %v673, %v669
  %v962 = vpack.c.b16 %v674, %v670
  %v963 = vpack.c.b16 %v675, %v671
  %v964 = vpack.c.b16 %v676, %v672
  %v965 = vpack.c.b16 %v681, %v677
  %v966 = vpack.c.b16 %v682, %v678
  %v967 = vpack.c.b16 %v683, %v679
  %v968 = vpack.c.b16 %v684, %v680
  %v969 = vpack.c.b16 %v689, %v685
  %v970 = vpack.c.b16 %v690, %v686
  %v971 = vpack.c.b16 %v691, %v687
  %v972 = vpack.c.b16 %v692, %v688
  %v973 = vpack.c.b16 %v697, %v693
  %v974 = vpack.c.b16 %v698, %v694
  %v975 = vpack.c.b16 %v699, %v695
  %v976 = vpack.c.b16 %v700, %v696
  %v977 = vpack.c.b16 %v705, %v701
  %v978 = vpack.c.b16 %v706, %v702
  %v979 = vpack.c.b16 %v707, %v703
  %v980 = vpack.c.b16 %v708, %v704
  %v981 = vpack.c.b16 %v713, %v709
  %v982 = vpack.c.b16 %v714, %v710
  %v983 = vpack.c.b16 %v715, %v711
  %v984 = vpack.c.b16 %v716, %v712
  %v985 = vpack.c.b16 %v721, %v717
  %v986 = vpack.c.b16 %v722, %v718
  %v987 = vpack.c.b16 %v723, %v719
  %v988 = vpack.c.b16 %v724, %v720
  %v989 = vpack.c.b16 %v729, %v725
  %v990 = vpack.c.b16 %v730, %v726
  %v991 = vpack.c.b16 %v731, %v727
  %v992 = vpack.c.b16 %v732, %v728
  %v993 = vpack.c.b16 %v737, %v733
  %v994 = vpack.c.b16 %v738, %v734
  %v995 = vpack.c.b16 %v739, %v735
  %v996 = vpack.c.b16 %v740, %v736
  %v997 = vpack.c.b16 %v745, %v741
  %v998 = vpack.c.b16 %v746, %v742
  %v999 = vpack.c.b16 %v747, %v743
  %v1000 = vpack.c.b16 %v748, %v744
  %v1001 = vpack.c.b16 %v753, %v749
  %v1002 = vpack.c.b16 %v754, %v750
  %v1003 = vpack.c.b16 %v755, %v751
  %v1004 = vpack.c.b16 %v756, %v752
  %v1005 = vpack.c.b16 %v761, %v757
  %v1006 = vpack.c.b16 %v762, %v758
  %v1007 = vpack.c.b16 %v763, %v759
  %v1008 = vpack.c.b16 %v764, %v760
  %v1009 = vpack.c.b16 %v769, %v765
  %v1010 = vpack.c.b16 %v770, %v766
  %v1011 = vpack.c.b16 %v771, %v767
  %v1012 = vpack.c.b16 %v772, %v768
  %v1013 = vpack.c.b16 %v777, %v773
  %v1014 = vpack.c.b16 %v778, %v774
  %v1015 = vpack.c.b16 %v779, %v775
  %v1016 = vpack.c.b16 %v780, %v776
  %v1017 = vpack.c.b16 %v785, %v781
  %v1018 = vpack.c.b16 %v786, %v782
  %v1019 = vpack.c.b16 %v787, %v783
  %v1020 = vpack.c.b16 %v788, %v784
  %v1021 = vpack.c.b16 %v793, %v789
  %v1022 = vpack.c.b16 %v794, %v790
  %v1023 = vpack.c.b16 %v795, %v791
  %v1024 = vpack.c.b16 %v796, %v792
  %v1025 = vpack.c.b16 %v801, %v797
  %v1026 = vpack.c.b16 %v802, %v798
  %v1027 = vpack.c.b16 %v803, %v799
  %v1028 = vpack.c.b16 %v804, %v800
  %v1029 = vpack.c.b16 %v809, %v805
  %v1030 = vpack.c.b16 %v810, %v806
  %v1031 = vpack.c.b16 %v811, %v807
  %v1032 = vpack.c.b16 %v812, %v808
  %v1033 = vpack.c.b16 %v817, %v813
  %v1034 = vpack.c.b16 %v818, %v814
  %v1035 = vpack.c.b16 %v819, %v815
  %v1036 = vpack.c.b16 %v820, %v816
  %v1037 = vpack.c.b16 %v825, %v821
  %v1038 = vpack.c.b16 %v826, %v822
  %v1039 = vpack.c.b16 %v827, %v823
  %v1040 = vpack.c.b16 %v828, %v824
  %v1041 = vpack.c.b16 %v833, %v829
  %v1042 = vpack.c.b16 %v834, %v830
  %v1043 = vpack.c.b16 %v835, %v831
  %v1044 = vpack.c.b16 %v836, %v832
  %v1045 = vpack.c.b16 %v841, %v837
  %v1046 = vpack.c.b16 %v842, %v838
  %v1047 = vpack.c.b16 %v843, %v839
  %v1048 = vpack.c.b16 %v844, %v840
  %v1049 = vpack.c.b16 %v849, %v845
  %v1050 = vpack.c.b16 %v850, %v846
  %v1051 = vpack.c.b16 %v851, %v847
  %v1052 = vpack.c.b16 %v852, %v848
  %v1053 = vpack.c.b16 %v857, %v853
  %v1054 = vpack.c.b16 %v858, %v854
  %v1055 = vpack.c.b16 %v859, %v855
  %v1056 = vpack.c.b16 %v860, %v856
  %vm1253 = vcmask 130048
  %v1255 = vsel %vm1253, %v266, 0
  %1257 = vmatprep.subr.bf16.mxu0 %v890
  %1258 = vmatpush1.bf16.msra.mxu0 %v889
  %1259 = vmatprep.subr.bf16.mxu0 %v886
  %1260 = vmatpush1.bf16.msra.mxu0 %v885
  %1261 = vmatprep.subr.bf16.mxu0 %v882
  %1262 = vmatpush1.bf16.msra.mxu0 %v881
  %1263 = vmatprep.subr.bf16.mxu0 %v878
  %1264 = vmatpush1.bf16.msra.mxu0 %v877
  %1265 = vmatprep.subr.bf16.mxu0 %v874
  %1266 = vmatpush1.bf16.msra.mxu0 %v873
  %1267 = vmatprep.subr.bf16.mxu0 %v870
  %1268 = vmatpush1.bf16.msra.mxu0 %v869
  %1269 = vmatprep.subr.bf16.mxu0 %v866
  %1270 = vmatpush1.bf16.msra.mxu0 %v865
  %1271 = vmatprep.subr.bf16.mxu0 %v862
  %1272 = vmatpush1.bf16.msra.mxu0 %v861
  %1273 = vmatprep.subr.bf16.mxu0 %v922
  %1274 = vmatpush2.bf16.msra.mxu0 %v921
  %1275 = vmatprep.subr.bf16.mxu0 %v918
  %1276 = vmatpush2.bf16.msra.mxu0 %v917
  %1277 = vmatprep.subr.bf16.mxu0 %v914
  %1278 = vmatpush2.bf16.msra.mxu0 %v913
  %1279 = vmatprep.subr.bf16.mxu0 %v910
  %1280 = vmatpush2.bf16.msra.mxu0 %v909
  %1281 = vmatprep.subr.bf16.mxu0 %v906
  %1282 = vmatpush2.bf16.msra.mxu0 %v905
  %1283 = vmatprep.subr.bf16.mxu0 %v902
  %1284 = vmatpush2.bf16.msra.mxu0 %v901
  %1285 = vmatprep.subr.bf16.mxu0 %v898
  %1286 = vmatpush2.bf16.msra.mxu0 %v897
  %1287 = vmatprep.subr.bf16.mxu0 %v894
  %1288 = vmatpush2.bf16.msra.mxu0 %v893
  %1289 = vmatprep.mubr.bf16.mxu0 %v261
  %1290 = vmatmul.mubr.bf16.gmra.mxu0 %v260
  %v1291 = vpop.f32.mrf.mxu0
  %v1292 = vadd.f32 %v232, %v1291
  %v1293 = vpop.f32.mrf.mxu0
  %v1294 = vadd.f32 %v236, %v1293
  %v1295 = vpop.f32.mrf.mxu0
  %v1296 = vpop.f32.mrf.mxu0
  %1297 = vdwg.mxu0
  %1298 = vmatprep.subr.bf16.mxu0 %v954
  %1299 = vmatpush1.bf16.msra.mxu0 %v953
  %1300 = vmatprep.subr.bf16.mxu0 %v950
  %1301 = vmatpush1.bf16.msra.mxu0 %v949
  %1302 = vmatprep.subr.bf16.mxu0 %v946
  %1303 = vmatpush1.bf16.msra.mxu0 %v945
  %1304 = vmatprep.subr.bf16.mxu0 %v942
  %1305 = vmatpush1.bf16.msra.mxu0 %v941
  %1306 = vmatprep.subr.bf16.mxu0 %v938
  %1307 = vmatpush1.bf16.msra.mxu0 %v937
  %1308 = vmatprep.subr.bf16.mxu0 %v934
  %1309 = vmatpush1.bf16.msra.mxu0 %v933
  %1310 = vmatprep.subr.bf16.mxu0 %v930
  %1311 = vmatpush1.bf16.msra.mxu0 %v929
  %1312 = vmatprep.subr.bf16.mxu0 %v926
  %1313 = vmatpush1.bf16.msra.mxu0 %v925
  %1314 = vmatprep.subr.bf16.mxu0 %v986
  %1315 = vmatpush2.bf16.msra.mxu0 %v985
  %1316 = vmatprep.subr.bf16.mxu0 %v982
  %1317 = vmatpush2.bf16.msra.mxu0 %v981
  %1318 = vmatprep.subr.bf16.mxu0 %v978
  %1319 = vmatpush2.bf16.msra.mxu0 %v977
  %1320 = vmatprep.subr.bf16.mxu0 %v974
  %1321 = vmatpush2.bf16.msra.mxu0 %v973
  %1322 = vmatprep.subr.bf16.mxu0 %v970
  %1323 = vmatpush2.bf16.msra.mxu0 %v969
  %1324 = vmatprep.subr.bf16.mxu0 %v966
  %1325 = vmatpush2.bf16.msra.mxu0 %v965
  %1326 = vmatprep.subr.bf16.mxu0 %v962
  %1327 = vmatpush2.bf16.msra.mxu0 %v961
  %1328 = vmatprep.subr.bf16.mxu0 %v958
  %1329 = vmatpush2.bf16.msra.mxu0 %v957
  %1330 = vmatprep.mubr.bf16.mxu0 %v263
  %1331 = vmatmul.mubr.bf16.gmra.mxu0 %v262
  %v1332 = vpop.f32.mrf.mxu0
  %v1333 = vadd.f32 %v1292, %v1332
  %v1334 = vpop.f32.mrf.mxu0
  %v1335 = vadd.f32 %v1294, %v1334
  %v1336 = vpop.f32.mrf.mxu0
  %v1337 = vpop.f32.mrf.mxu0
  %1338 = vdwg.mxu0
  %1339 = vmatprep.subr.bf16.mxu0 %v1018
  %1340 = vmatpush1.bf16.msra.mxu0 %v1017
  %1341 = vmatprep.subr.bf16.mxu0 %v1014
  %1342 = vmatpush1.bf16.msra.mxu0 %v1013
  %1343 = vmatprep.subr.bf16.mxu0 %v1010
  %1344 = vmatpush1.bf16.msra.mxu0 %v1009
  %1345 = vmatprep.subr.bf16.mxu0 %v1006
  %1346 = vmatpush1.bf16.msra.mxu0 %v1005
  %1347 = vmatprep.subr.bf16.mxu0 %v1002
  %1348 = vmatpush1.bf16.msra.mxu0 %v1001
  %1349 = vmatprep.subr.bf16.mxu0 %v998
  %1350 = vmatpush1.bf16.msra.mxu0 %v997
  %1351 = vmatprep.subr.bf16.mxu0 %v994
  %1352 = vmatpush1.bf16.msra.mxu0 %v993
  %1353 = vmatprep.subr.bf16.mxu0 %v990
  %1354 = vmatpush1.bf16.msra.mxu0 %v989
  %1355 = vmatprep.subr.bf16.mxu0 %v1050
  %1356 = vmatpush2.bf16.msra.mxu0 %v1049
  %1357 = vmatprep.subr.bf16.mxu0 %v1046
  %1358 = vmatpush2.bf16.msra.mxu0 %v1045
  %1359 = vmatprep.subr.bf16.mxu0 %v1042
  %1360 = vmatpush2.bf16.msra.mxu0 %v1041
  %1361 = vmatprep.subr.bf16.mxu0 %v1038
  %1362 = vmatpush2.bf16.msra.mxu0 %v1037
  %1363 = vmatprep.subr.bf16.mxu0 %v1034
  %1364 = vmatpush2.bf16.msra.mxu0 %v1033
  %1365 = vmatprep.subr.bf16.mxu0 %v1030
  %1366 = vmatpush2.bf16.msra.mxu0 %v1029
  %1367 = vmatprep.subr.bf16.mxu0 %v1026
  %1368 = vmatpush2.bf16.msra.mxu0 %v1025
  %1369 = vmatprep.subr.bf16.mxu0 %v1022
  %1370 = vmatpush2.bf16.msra.mxu0 %v1021
  %1371 = vmatprep.mubr.bf16.mxu0 %v265
  %1372 = vmatmul.mubr.bf16.gmra.mxu0 %v264
  %v1373 = vpop.f32.mrf.mxu0
  %v1374 = vadd.f32 %v1333, %v1373
  %v1375 = vpop.f32.mrf.mxu0
  %v1376 = vadd.f32 %v1335, %v1375
  %v1377 = vpop.f32.mrf.mxu0
  %v1378 = vpop.f32.mrf.mxu0
  %1379 = vdwg.mxu0
  %1380 = vmatprep.subr.bf16.mxu0 0
  %1381 = vmatpush1.bf16.msra.mxu0 0
  %1382 = vmatprep.subr.bf16.mxu0 0
  %1383 = vmatpush1.bf16.msra.mxu0 0
  %1384 = vmatprep.subr.bf16.mxu0 0
  %1385 = vmatpush1.bf16.msra.mxu0 0
  %1386 = vmatprep.subr.bf16.mxu0 0
  %1387 = vmatpush1.bf16.msra.mxu0 0
  %1388 = vmatprep.subr.bf16.mxu0 0
  %1389 = vmatpush1.bf16.msra.mxu0 0
  %1390 = vmatprep.subr.bf16.mxu0 0
  %1391 = vmatpush1.bf16.msra.mxu0 0
  %1392 = vmatprep.subr.bf16.mxu0 0
  %1393 = vmatpush1.bf16.msra.mxu0 0
  %1394 = vmatprep.subr.bf16.mxu0 %v1054
  %1395 = vmatpush1.bf16.msra.mxu0 %v1053
  %1396 = vmatprep.subr.bf16.mxu0 0
  %1397 = vmatpush2.bf16.msra.mxu0 0
  %1398 = vmatprep.subr.bf16.mxu0 0
  %1399 = vmatpush2.bf16.msra.mxu0 0
  %1400 = vmatprep.subr.bf16.mxu0 0
  %1401 = vmatpush2.bf16.msra.mxu0 0
  %1402 = vmatprep.subr.bf16.mxu0 0
  %1403 = vmatpush2.bf16.msra.mxu0 0
  %1404 = vmatprep.subr.bf16.mxu0 0
  %1405 = vmatpush2.bf16.msra.mxu0 0
  %1406 = vmatprep.subr.bf16.mxu0 0
  %1407 = vmatpush2.bf16.msra.mxu0 0
  %1408 = vmatprep.subr.bf16.mxu0 0
  %1409 = vmatpush2.bf16.msra.mxu0 0
  %1410 = vmatprep.subr.bf16.mxu0 0
  %1411 = vmatpush2.bf16.msra.mxu0 0
  %1412 = vmatprep.mubr.bf16.mxu0 0
  %1413 = vmatmul.mubr.bf16.gmra.mxu0 %v1255
  %v1414 = vpop.f32.mrf.mxu0
  %v1415 = vadd.f32 %v1374, %v1414
  %v1416 = vpop.f32.mrf.mxu0
  %v1417 = vadd.f32 %v1376, %v1416
  %v1418 = vpop.f32.mrf.mxu0
  %v1419 = vpop.f32.mrf.mxu0
  %1420 = vdwg.mxu0
  %1421 = vmatprep.subr.bf16.mxu0 %v892
  %1422 = vmatpush1.bf16.msra.mxu0 %v891
  %1423 = vmatprep.subr.bf16.mxu0 %v888
  %1424 = vmatpush1.bf16.msra.mxu0 %v887
  %1425 = vmatprep.subr.bf16.mxu0 %v884
  %1426 = vmatpush1.bf16.msra.mxu0 %v883
  %1427 = vmatprep.subr.bf16.mxu0 %v880
  %1428 = vmatpush1.bf16.msra.mxu0 %v879
  %1429 = vmatprep.subr.bf16.mxu0 %v876
  %1430 = vmatpush1.bf16.msra.mxu0 %v875
  %1431 = vmatprep.subr.bf16.mxu0 %v872
  %1432 = vmatpush1.bf16.msra.mxu0 %v871
  %1433 = vmatprep.subr.bf16.mxu0 %v868
  %1434 = vmatpush1.bf16.msra.mxu0 %v867
  %1435 = vmatprep.subr.bf16.mxu0 %v864
  %1436 = vmatpush1.bf16.msra.mxu0 %v863
  %1437 = vmatprep.subr.bf16.mxu0 %v924
  %1438 = vmatpush2.bf16.msra.mxu0 %v923
  %1439 = vmatprep.subr.bf16.mxu0 %v920
  %1440 = vmatpush2.bf16.msra.mxu0 %v919
  %1441 = vmatprep.subr.bf16.mxu0 %v916
  %1442 = vmatpush2.bf16.msra.mxu0 %v915
  %1443 = vmatprep.subr.bf16.mxu0 %v912
  %1444 = vmatpush2.bf16.msra.mxu0 %v911
  %1445 = vmatprep.subr.bf16.mxu0 %v908
  %1446 = vmatpush2.bf16.msra.mxu0 %v907
  %1447 = vmatprep.subr.bf16.mxu0 %v904
  %1448 = vmatpush2.bf16.msra.mxu0 %v903
  %1449 = vmatprep.subr.bf16.mxu0 %v900
  %1450 = vmatpush2.bf16.msra.mxu0 %v899
  %1451 = vmatprep.subr.bf16.mxu0 %v896
  %1452 = vmatpush2.bf16.msra.mxu0 %v895
  %1453 = vmatprep.mubr.bf16.mxu0 %v261
  %1454 = vmatmul.mubr.bf16.gmra.mxu0 %v260
  %v1455 = vpop.f32.mrf.mxu0
  %v1456 = vadd.f32 %v240, %v1455
  %v1457 = vpop.f32.mrf.mxu0
  %v1458 = vadd.f32 %v244, %v1457
  %v1459 = vpop.f32.mrf.mxu0
  %v1460 = vpop.f32.mrf.mxu0
  %1461 = vdwg.mxu0
  %1462 = vmatprep.subr.bf16.mxu0 %v956
  %1463 = vmatpush1.bf16.msra.mxu0 %v955
  %1464 = vmatprep.subr.bf16.mxu0 %v952
  %1465 = vmatpush1.bf16.msra.mxu0 %v951
  %1466 = vmatprep.subr.bf16.mxu0 %v948
  %1467 = vmatpush1.bf16.msra.mxu0 %v947
  %1468 = vmatprep.subr.bf16.mxu0 %v944
  %1469 = vmatpush1.bf16.msra.mxu0 %v943
  %1470 = vmatprep.subr.bf16.mxu0 %v940
  %1471 = vmatpush1.bf16.msra.mxu0 %v939
  %1472 = vmatprep.subr.bf16.mxu0 %v936
  %1473 = vmatpush1.bf16.msra.mxu0 %v935
  %1474 = vmatprep.subr.bf16.mxu0 %v932
  %1475 = vmatpush1.bf16.msra.mxu0 %v931
  %1476 = vmatprep.subr.bf16.mxu0 %v928
  %1477 = vmatpush1.bf16.msra.mxu0 %v927
  %1478 = vmatprep.subr.bf16.mxu0 %v988
  %1479 = vmatpush2.bf16.msra.mxu0 %v987
  %1480 = vmatprep.subr.bf16.mxu0 %v984
  %1481 = vmatpush2.bf16.msra.mxu0 %v983
  %1482 = vmatprep.subr.bf16.mxu0 %v980
  %1483 = vmatpush2.bf16.msra.mxu0 %v979
  %1484 = vmatprep.subr.bf16.mxu0 %v976
  %1485 = vmatpush2.bf16.msra.mxu0 %v975
  %1486 = vmatprep.subr.bf16.mxu0 %v972
  %1487 = vmatpush2.bf16.msra.mxu0 %v971
  %1488 = vmatprep.subr.bf16.mxu0 %v968
  %1489 = vmatpush2.bf16.msra.mxu0 %v967
  %1490 = vmatprep.subr.bf16.mxu0 %v964
  %1491 = vmatpush2.bf16.msra.mxu0 %v963
  %1492 = vmatprep.subr.bf16.mxu0 %v960
  %1493 = vmatpush2.bf16.msra.mxu0 %v959
  %1494 = vmatprep.mubr.bf16.mxu0 %v263
  %1495 = vmatmul.mubr.bf16.gmra.mxu0 %v262
  %v1496 = vpop.f32.mrf.mxu0
  %v1497 = vadd.f32 %v1456, %v1496
  %v1498 = vpop.f32.mrf.mxu0
  %v1499 = vadd.f32 %v1458, %v1498
  %v1500 = vpop.f32.mrf.mxu0
  %v1501 = vpop.f32.mrf.mxu0
  %1502 = vdwg.mxu0
  %1503 = vmatprep.subr.bf16.mxu0 %v1020
  %1504 = vmatpush1.bf16.msra.mxu0 %v1019
  %1505 = vmatprep.subr.bf16.mxu0 %v1016
  %1506 = vmatpush1.bf16.msra.mxu0 %v1015
  %1507 = vmatprep.subr.bf16.mxu0 %v1012
  %1508 = vmatpush1.bf16.msra.mxu0 %v1011
  %1509 = vmatprep.subr.bf16.mxu0 %v1008
  %1510 = vmatpush1.bf16.msra.mxu0 %v1007
  %1511 = vmatprep.subr.bf16.mxu0 %v1004
  %1512 = vmatpush1.bf16.msra.mxu0 %v1003
  %1513 = vmatprep.subr.bf16.mxu0 %v1000
  %1514 = vmatpush1.bf16.msra.mxu0 %v999
  %1515 = vmatprep.subr.bf16.mxu0 %v996
  %1516 = vmatpush1.bf16.msra.mxu0 %v995
  %1517 = vmatprep.subr.bf16.mxu0 %v992
  %1518 = vmatpush1.bf16.msra.mxu0 %v991
  %1519 = vmatprep.subr.bf16.mxu0 %v1052
  %1520 = vmatpush2.bf16.msra.mxu0 %v1051
  %1521 = vmatprep.subr.bf16.mxu0 %v1048
  %1522 = vmatpush2.bf16.msra.mxu0 %v1047
  %1523 = vmatprep.subr.bf16.mxu0 %v1044
  %1524 = vmatpush2.bf16.msra.mxu0 %v1043
  %1525 = vmatprep.subr.bf16.mxu0 %v1040
  %1526 = vmatpush2.bf16.msra.mxu0 %v1039
  %1527 = vmatprep.subr.bf16.mxu0 %v1036
  %1528 = vmatpush2.bf16.msra.mxu0 %v1035
  %1529 = vmatprep.subr.bf16.mxu0 %v1032
  %1530 = vmatpush2.bf16.msra.mxu0 %v1031
  %1531 = vmatprep.subr.bf16.mxu0 %v1028
  %1532 = vmatpush2.bf16.msra.mxu0 %v1027
  %1533 = vmatprep.subr.bf16.mxu0 %v1024
  %1534 = vmatpush2.bf16.msra.mxu0 %v1023
  %1535 = vmatprep.mubr.bf16.mxu0 %v265
  %1536 = vmatmul.mubr.bf16.gmra.mxu0 %v264
  %v1537 = vpop.f32.mrf.mxu0
  %v1538 = vadd.f32 %v1497, %v1537
  %v1539 = vpop.f32.mrf.mxu0
  %v1540 = vadd.f32 %v1499, %v1539
  %v1541 = vpop.f32.mrf.mxu0
  %v1542 = vpop.f32.mrf.mxu0
  %1543 = vdwg.mxu0
  %1544 = vmatprep.subr.bf16.mxu0 0
  %1545 = vmatpush1.bf16.msra.mxu0 0
  %1546 = vmatprep.subr.bf16.mxu0 0
  %1547 = vmatpush1.bf16.msra.mxu0 0
  %1548 = vmatprep.subr.bf16.mxu0 0
  %1549 = vmatpush1.bf16.msra.mxu0 0
  %1550 = vmatprep.subr.bf16.mxu0 0
  %1551 = vmatpush1.bf16.msra.mxu0 0
  %1552 = vmatprep.subr.bf16.mxu0 0
  %1553 = vmatpush1.bf16.msra.mxu0 0
  %1554 = vmatprep.subr.bf16.mxu0 0
  %1555 = vmatpush1.bf16.msra.mxu0 0
  %1556 = vmatprep.subr.bf16.mxu0 0
  %1557 = vmatpush1.bf16.msra.mxu0 0
  %1558 = vmatprep.subr.bf16.mxu0 %v1056
  %1559 = vmatpush1.bf16.msra.mxu0 %v1055
  %1560 = vmatprep.subr.bf16.mxu0 0
  %1561 = vmatpush2.bf16.msra.mxu0 0
  %1562 = vmatprep.subr.bf16.mxu0 0
  %1563 = vmatpush2.bf16.msra.mxu0 0
  %1564 = vmatprep.subr.bf16.mxu0 0
  %1565 = vmatpush2.bf16.msra.mxu0 0
  %1566 = vmatprep.subr.bf16.mxu0 0
  %1567 = vmatpush2.bf16.msra.mxu0 0
  %1568 = vmatprep.subr.bf16.mxu0 0
  %1569 = vmatpush2.bf16.msra.mxu0 0
  %1570 = vmatprep.subr.bf16.mxu0 0
  %1571 = vmatpush2.bf16.msra.mxu0 0
  %1572 = vmatprep.subr.bf16.mxu0 0
  %1573 = vmatpush2.bf16.msra.mxu0 0
  %1574 = vmatprep.subr.bf16.mxu0 0
  %1575 = vmatpush2.bf16.msra.mxu0 0
  %1576 = vmatprep.mubr.bf16.mxu0 0
  %1577 = vmatmul.mubr.bf16.gmra.mxu0 %v1255
  %v1578 = vpop.f32.mrf.mxu0
  %v1579 = vadd.f32 %v1538, %v1578
  %v1580 = vpop.f32.mrf.mxu0
  %v1581 = vadd.f32 %v1540, %v1580
  %v1582 = vpop.f32.mrf.mxu0
  %v1583 = vpop.f32.mrf.mxu0
  %1584 = vdwg.mxu0
  %v1585 = vmax.f32 %v1415, 0.0
  %v1586 = vmax.f32 %v1417, 0.0
  %v1587 = vmax.f32 %v1579, 0.0
  %v1588 = vmax.f32 %v1581, 0.0
  %v1589 = vpack.c.bf16 %v1585, %v1585
  %v1590 = vpack.c.bf16 %v1586, %v1586
  %v1591 = vpack.c.bf16 %v1587, %v1587
  %v1592 = vpack.c.bf16 %v1588, %v1588
  %v1593 = vld [vmem:[%s3] sm:$0xff]
  %v1594 = vld [vmem:[%s3 + $0x8] sm:$0xff]
  %v1595 = vld [vmem:[%s3 + $0x10] sm:$0xff]
  %v1596 = vld [vmem:[%s3 + $0x18] sm:$0xff]
  %v1597 = vld [vmem:[%s3 + $0x20] sm:$0xff]
  %v1598 = vld [vmem:[%s3 + $0x28] sm:$0xff]
  %v1599 = vld [vmem:[%s3 + $0x30] sm:$0xff]
  %v1600 = vld [vmem:[%s3 + $0x38] sm:$0xff]
  %v1601 = vld [vmem:[%s3 + $0x40] sm:$0xff]
  %v1602 = vld [vmem:[%s3 + $0x48] sm:$0xff]
  %v1603 = vld [vmem:[%s3 + $0x50] sm:$0xff]
  %v1604 = vld [vmem:[%s3 + $0x58] sm:$0xff]
  %v1605 = vld [vmem:[%s3 + $0x60] sm:$0xff]
  %v1606 = vld [vmem:[%s3 + $0x68] sm:$0xff]
  %v1607 = vld [vmem:[%s3 + $0x70] sm:$0xff]
  %v1608 = vld [vmem:[%s3 + $0x78] sm:$0xff]
  %v1609 = vld [vmem:[%s3 + $0x80] sm:$0xff]
  %v1610 = vld [vmem:[%s3 + $0x88] sm:$0xff]
  %v1611 = vld [vmem:[%s3 + $0x90] sm:$0xff]
  %v1612 = vld [vmem:[%s3 + $0x98] sm:$0xff]
  %v1613 = vld [vmem:[%s3 + $0xa0] sm:$0xff]
  %v1614 = vld [vmem:[%s3 + $0xa8] sm:$0xff]
  %v1615 = vld [vmem:[%s3 + $0xb0] sm:$0xff]
  %v1616 = vld [vmem:[%s3 + $0xb8] sm:$0xff]
  %v1617 = vld [vmem:[%s3 + $0xc0] sm:$0xff]
  %v1618 = vld [vmem:[%s3 + $0xc8] sm:$0xff]
  %v1619 = vld [vmem:[%s3 + $0xd0] sm:$0xff]
  %v1620 = vld [vmem:[%s3 + $0xd8] sm:$0xff]
  %v1621 = vld [vmem:[%s3 + $0xe0] sm:$0xff]
  %v1622 = vld [vmem:[%s3 + $0xe8] sm:$0xff]
  %v1623 = vld [vmem:[%s3 + $0xf0] sm:$0xff]
  %v1624 = vld [vmem:[%s3 + $0xf8] sm:$0xff]
  %v1625 = vld [vmem:[%s3 + $0x100] sm:$0xff]
  %v1626 = vld [vmem:[%s3 + $0x108] sm:$0xff]
  %v1627 = vld [vmem:[%s3 + $0x110] sm:$0xff]
  %v1628 = vld [vmem:[%s3 + $0x118] sm:$0xff]
  %v1629 = vld [vmem:[%s3 + $0x120] sm:$0xff]
  %v1630 = vld [vmem:[%s3 + $0x128] sm:$0xff]
  %v1631 = vld [vmem:[%s3 + $0x130] sm:$0xff]
  %v1632 = vld [vmem:[%s3 + $0x138] sm:$0xff]
  %v1633 = vld [vmem:[%s3 + $0x140] sm:$0xff]
  %v1634 = vld [vmem:[%s3 + $0x148] sm:$0xff]
  %v1635 = vld [vmem:[%s3 + $0x150] sm:$0xff]
  %v1636 = vld [vmem:[%s3 + $0x158] sm:$0xff]
  %v1637 = vld [vmem:[%s3 + $0x160] sm:$0xff]
  %v1638 = vld [vmem:[%s3 + $0x168] sm:$0xff]
  %v1639 = vld [vmem:[%s3 + $0x170] sm:$0xff]
  %v1640 = vld [vmem:[%s3 + $0x178] sm:$0xff]
  %v1641 = vld [vmem:[%s3 + $0x180] sm:$0xff]
  %v1642 = vld [vmem:[%s3 + $0x188] sm:$0xff]
  %v1643 = vld [vmem:[%s3 + $0x190] sm:$0xff]
  %v1644 = vld [vmem:[%s3 + $0x198] sm:$0xff]
  %v1645 = vld [vmem:[%s3 + $0x1a0] sm:$0xff]
  %v1646 = vld [vmem:[%s3 + $0x1a8] sm:$0xff]
  %v1647 = vld [vmem:[%s3 + $0x1b0] sm:$0xff]
  %v1648 = vld [vmem:[%s3 + $0x1b8] sm:$0xff]
  %v1649 = vld [vmem:[%s3 + $0x1c0] sm:$0xff]
  %v1650 = vld [vmem:[%s3 + $0x1c8] sm:$0xff]
  %v1651 = vld [vmem:[%s3 + $0x1d0] sm:$0xff]
  %v1652 = vld [vmem:[%s3 + $0x1d8] sm:$0xff]
  %v1653 = vld [vmem:[%s3 + $0x1e0] sm:$0xff]
  %v1654 = vld [vmem:[%s3 + $0x1e8] sm:$0xff]
  %v1655 = vld [vmem:[%s3 + $0x1f0] sm:$0xff]
  %v1656 = vld [vmem:[%s3 + $0x1f8] sm:$0xff]
  %v1657 = vld [vmem:[%s4] sm:$0x3]
  %v1659 = vlaneseq
  %v1660 = vshrl.u32 %v1659, 7
  %v1661 = vsub.s32 0, %v1660
  %v1662 = vrot.slane %v1657, %v1661
  %v1663 = vlaneseq
  %v1664 = vshrl.u32 %v1663, 7
  %v1665 = vsub.s32 1, %v1664
  %v1666 = vrot.slane %v1657, %v1665
  %v1733 = vunpack.c.l.b16 %v1593
  %v1734 = vunpack.c.h.b16 %v1593
  %v1735 = vunpack.c.l.b16 %v1594
  %v1736 = vunpack.c.h.b16 %v1594
  %v1737 = vunpack.c.l.b16 %v1595
  %v1738 = vunpack.c.h.b16 %v1595
  %v1739 = vunpack.c.l.b16 %v1596
  %v1740 = vunpack.c.h.b16 %v1596
  %v1741 = vunpack.c.l.b16 %v1597
  %v1742 = vunpack.c.h.b16 %v1597
  %v1743 = vunpack.c.l.b16 %v1598
  %v1744 = vunpack.c.h.b16 %v1598
  %v1745 = vunpack.c.l.b16 %v1599
  %v1746 = vunpack.c.h.b16 %v1599
  %v1747 = vunpack.c.l.b16 %v1600
  %v1748 = vunpack.c.h.b16 %v1600
  %v1749 = vunpack.c.l.b16 %v1601
  %v1750 = vunpack.c.h.b16 %v1601
  %v1751 = vunpack.c.l.b16 %v1602
  %v1752 = vunpack.c.h.b16 %v1602
  %v1753 = vunpack.c.l.b16 %v1603
  %v1754 = vunpack.c.h.b16 %v1603
  %v1755 = vunpack.c.l.b16 %v1604
  %v1756 = vunpack.c.h.b16 %v1604
  %v1757 = vunpack.c.l.b16 %v1605
  %v1758 = vunpack.c.h.b16 %v1605
  %v1759 = vunpack.c.l.b16 %v1606
  %v1760 = vunpack.c.h.b16 %v1606
  %v1761 = vunpack.c.l.b16 %v1607
  %v1762 = vunpack.c.h.b16 %v1607
  %v1763 = vunpack.c.l.b16 %v1608
  %v1764 = vunpack.c.h.b16 %v1608
  %v1765 = vunpack.c.l.b16 %v1609
  %v1766 = vunpack.c.h.b16 %v1609
  %v1767 = vunpack.c.l.b16 %v1610
  %v1768 = vunpack.c.h.b16 %v1610
  %v1769 = vunpack.c.l.b16 %v1611
  %v1770 = vunpack.c.h.b16 %v1611
  %v1771 = vunpack.c.l.b16 %v1612
  %v1772 = vunpack.c.h.b16 %v1612
  %v1773 = vunpack.c.l.b16 %v1613
  %v1774 = vunpack.c.h.b16 %v1613
  %v1775 = vunpack.c.l.b16 %v1614
  %v1776 = vunpack.c.h.b16 %v1614
  %v1777 = vunpack.c.l.b16 %v1615
  %v1778 = vunpack.c.h.b16 %v1615
  %v1779 = vunpack.c.l.b16 %v1616
  %v1780 = vunpack.c.h.b16 %v1616
  %v1781 = vunpack.c.l.b16 %v1617
  %v1782 = vunpack.c.h.b16 %v1617
  %v1783 = vunpack.c.l.b16 %v1618
  %v1784 = vunpack.c.h.b16 %v1618
  %v1785 = vunpack.c.l.b16 %v1619
  %v1786 = vunpack.c.h.b16 %v1619
  %v1787 = vunpack.c.l.b16 %v1620
  %v1788 = vunpack.c.h.b16 %v1620
  %v1789 = vunpack.c.l.b16 %v1621
  %v1790 = vunpack.c.h.b16 %v1621
  %v1791 = vunpack.c.l.b16 %v1622
  %v1792 = vunpack.c.h.b16 %v1622
  %v1793 = vunpack.c.l.b16 %v1623
  %v1794 = vunpack.c.h.b16 %v1623
  %v1795 = vunpack.c.l.b16 %v1624
  %v1796 = vunpack.c.h.b16 %v1624
  %v1797 = vunpack.c.l.b16 %v1625
  %v1798 = vunpack.c.h.b16 %v1625
  %v1799 = vunpack.c.l.b16 %v1626
  %v1800 = vunpack.c.h.b16 %v1626
  %v1801 = vunpack.c.l.b16 %v1627
  %v1802 = vunpack.c.h.b16 %v1627
  %v1803 = vunpack.c.l.b16 %v1628
  %v1804 = vunpack.c.h.b16 %v1628
  %v1805 = vunpack.c.l.b16 %v1629
  %v1806 = vunpack.c.h.b16 %v1629
  %v1807 = vunpack.c.l.b16 %v1630
  %v1808 = vunpack.c.h.b16 %v1630
  %v1809 = vunpack.c.l.b16 %v1631
  %v1810 = vunpack.c.h.b16 %v1631
  %v1811 = vunpack.c.l.b16 %v1632
  %v1812 = vunpack.c.h.b16 %v1632
  %v1813 = vunpack.c.l.b16 %v1633
  %v1814 = vunpack.c.h.b16 %v1633
  %v1815 = vunpack.c.l.b16 %v1634
  %v1816 = vunpack.c.h.b16 %v1634
  %v1817 = vunpack.c.l.b16 %v1635
  %v1818 = vunpack.c.h.b16 %v1635
  %v1819 = vunpack.c.l.b16 %v1636
  %v1820 = vunpack.c.h.b16 %v1636
  %v1821 = vunpack.c.l.b16 %v1637
  %v1822 = vunpack.c.h.b16 %v1637
  %v1823 = vunpack.c.l.b16 %v1638
  %v1824 = vunpack.c.h.b16 %v1638
  %v1825 = vunpack.c.l.b16 %v1639
  %v1826 = vunpack.c.h.b16 %v1639
  %v1827 = vunpack.c.l.b16 %v1640
  %v1828 = vunpack.c.h.b16 %v1640
  %v1829 = vunpack.c.l.b16 %v1641
  %v1830 = vunpack.c.h.b16 %v1641
  %v1831 = vunpack.c.l.b16 %v1642
  %v1832 = vunpack.c.h.b16 %v1642
  %v1833 = vunpack.c.l.b16 %v1643
  %v1834 = vunpack.c.h.b16 %v1643
  %v1835 = vunpack.c.l.b16 %v1644
  %v1836 = vunpack.c.h.b16 %v1644
  %v1837 = vunpack.c.l.b16 %v1645
  %v1838 = vunpack.c.h.b16 %v1645
  %v1839 = vunpack.c.l.b16 %v1646
  %v1840 = vunpack.c.h.b16 %v1646
  %v1841 = vunpack.c.l.b16 %v1647
  %v1842 = vunpack.c.h.b16 %v1647
  %v1843 = vunpack.c.l.b16 %v1648
  %v1844 = vunpack.c.h.b16 %v1648
  %v1845 = vunpack.c.l.b16 %v1649
  %v1846 = vunpack.c.h.b16 %v1649
  %v1847 = vunpack.c.l.b16 %v1650
  %v1848 = vunpack.c.h.b16 %v1650
  %v1849 = vunpack.c.l.b16 %v1651
  %v1850 = vunpack.c.h.b16 %v1651
  %v1851 = vunpack.c.l.b16 %v1652
  %v1852 = vunpack.c.h.b16 %v1652
  %v1853 = vunpack.c.l.b16 %v1653
  %v1854 = vunpack.c.h.b16 %v1653
  %v1855 = vunpack.c.l.b16 %v1654
  %v1856 = vunpack.c.h.b16 %v1654
  %v1857 = vunpack.c.l.b16 %v1655
  %v1858 = vunpack.c.h.b16 %v1655
  %v1859 = vunpack.c.l.b16 %v1656
  %v1860 = vunpack.c.h.b16 %v1656
  %v1861 = vpack.c.b16 %v1735, %v1733
  %v1862 = vpack.c.b16 %v1736, %v1734
  %v1863 = vpack.c.b16 %v1739, %v1737
  %v1864 = vpack.c.b16 %v1740, %v1738
  %v1865 = vpack.c.b16 %v1743, %v1741
  %v1866 = vpack.c.b16 %v1744, %v1742
  %v1867 = vpack.c.b16 %v1747, %v1745
  %v1868 = vpack.c.b16 %v1748, %v1746
  %v1869 = vpack.c.b16 %v1751, %v1749
  %v1870 = vpack.c.b16 %v1752, %v1750
  %v1871 = vpack.c.b16 %v1755, %v1753
  %v1872 = vpack.c.b16 %v1756, %v1754
  %v1873 = vpack.c.b16 %v1759, %v1757
  %v1874 = vpack.c.b16 %v1760, %v1758
  %v1875 = vpack.c.b16 %v1763, %v1761
  %v1876 = vpack.c.b16 %v1764, %v1762
  %v1877 = vpack.c.b16 %v1767, %v1765
  %v1878 = vpack.c.b16 %v1768, %v1766
  %v1879 = vpack.c.b16 %v1771, %v1769
  %v1880 = vpack.c.b16 %v1772, %v1770
  %v1881 = vpack.c.b16 %v1775, %v1773
  %v1882 = vpack.c.b16 %v1776, %v1774
  %v1883 = vpack.c.b16 %v1779, %v1777
  %v1884 = vpack.c.b16 %v1780, %v1778
  %v1885 = vpack.c.b16 %v1783, %v1781
  %v1886 = vpack.c.b16 %v1784, %v1782
  %v1887 = vpack.c.b16 %v1787, %v1785
  %v1888 = vpack.c.b16 %v1788, %v1786
  %v1889 = vpack.c.b16 %v1791, %v1789
  %v1890 = vpack.c.b16 %v1792, %v1790
  %v1891 = vpack.c.b16 %v1795, %v1793
  %v1892 = vpack.c.b16 %v1796, %v1794
  %v1893 = vpack.c.b16 %v1799, %v1797
  %v1894 = vpack.c.b16 %v1800, %v1798
  %v1895 = vpack.c.b16 %v1803, %v1801
  %v1896 = vpack.c.b16 %v1804, %v1802
  %v1897 = vpack.c.b16 %v1807, %v1805
  %v1898 = vpack.c.b16 %v1808, %v1806
  %v1899 = vpack.c.b16 %v1811, %v1809
  %v1900 = vpack.c.b16 %v1812, %v1810
  %v1901 = vpack.c.b16 %v1815, %v1813
  %v1902 = vpack.c.b16 %v1816, %v1814
  %v1903 = vpack.c.b16 %v1819, %v1817
  %v1904 = vpack.c.b16 %v1820, %v1818
  %v1905 = vpack.c.b16 %v1823, %v1821
  %v1906 = vpack.c.b16 %v1824, %v1822
  %v1907 = vpack.c.b16 %v1827, %v1825
  %v1908 = vpack.c.b16 %v1828, %v1826
  %v1909 = vpack.c.b16 %v1831, %v1829
  %v1910 = vpack.c.b16 %v1832, %v1830
  %v1911 = vpack.c.b16 %v1835, %v1833
  %v1912 = vpack.c.b16 %v1836, %v1834
  %v1913 = vpack.c.b16 %v1839, %v1837
  %v1914 = vpack.c.b16 %v1840, %v1838
  %v1915 = vpack.c.b16 %v1843, %v1841
  %v1916 = vpack.c.b16 %v1844, %v1842
  %v1917 = vpack.c.b16 %v1847, %v1845
  %v1918 = vpack.c.b16 %v1848, %v1846
  %v1919 = vpack.c.b16 %v1851, %v1849
  %v1920 = vpack.c.b16 %v1852, %v1850
  %v1921 = vpack.c.b16 %v1855, %v1853
  %v1922 = vpack.c.b16 %v1856, %v1854
  %v1923 = vpack.c.b16 %v1859, %v1857
  %v1924 = vpack.c.b16 %v1860, %v1858
  %1989 = vmatprep.subr.bf16.mxu0 %v1876
  %1990 = vmatpush1.bf16.msra.mxu0 %v1875
  %1991 = vmatprep.subr.bf16.mxu0 %v1874
  %1992 = vmatpush1.bf16.msra.mxu0 %v1873
  %1993 = vmatprep.subr.bf16.mxu0 %v1872
  %1994 = vmatpush1.bf16.msra.mxu0 %v1871
  %1995 = vmatprep.subr.bf16.mxu0 %v1870
  %1996 = vmatpush1.bf16.msra.mxu0 %v1869
  %1997 = vmatprep.subr.bf16.mxu0 %v1868
  %1998 = vmatpush1.bf16.msra.mxu0 %v1867
  %1999 = vmatprep.subr.bf16.mxu0 %v1866
  %2000 = vmatpush1.bf16.msra.mxu0 %v1865
  %2001 = vmatprep.subr.bf16.mxu0 %v1864
  %2002 = vmatpush1.bf16.msra.mxu0 %v1863
  %2003 = vmatprep.subr.bf16.mxu0 %v1862
  %2004 = vmatpush1.bf16.msra.mxu0 %v1861
  %2005 = vmatprep.subr.bf16.mxu0 %v1892
  %2006 = vmatpush2.bf16.msra.mxu0 %v1891
  %2007 = vmatprep.subr.bf16.mxu0 %v1890
  %2008 = vmatpush2.bf16.msra.mxu0 %v1889
  %2009 = vmatprep.subr.bf16.mxu0 %v1888
  %2010 = vmatpush2.bf16.msra.mxu0 %v1887
  %2011 = vmatprep.subr.bf16.mxu0 %v1886
  %2012 = vmatpush2.bf16.msra.mxu0 %v1885
  %2013 = vmatprep.subr.bf16.mxu0 %v1884
  %2014 = vmatpush2.bf16.msra.mxu0 %v1883
  %2015 = vmatprep.subr.bf16.mxu0 %v1882
  %2016 = vmatpush2.bf16.msra.mxu0 %v1881
  %2017 = vmatprep.subr.bf16.mxu0 %v1880
  %2018 = vmatpush2.bf16.msra.mxu0 %v1879
  %2019 = vmatprep.subr.bf16.mxu0 %v1878
  %2020 = vmatpush2.bf16.msra.mxu0 %v1877
  %2021 = vmatprep.mubr.bf16.mxu0 %v1590
  %2022 = vmatmul.mubr.bf16.gmra.mxu0 %v1589
  %v2023 = vpop.f32.mrf.mxu0
  %v2024 = vadd.f32 %v1662, %v2023
  %v2025 = vpop.f32.mrf.mxu0
  %v2026 = vadd.f32 %v1666, %v2025
  %v2027 = vpop.f32.mrf.mxu0
  %v2028 = vpop.f32.mrf.mxu0
  %2029 = vdwg.mxu0
  %2030 = vmatprep.subr.bf16.mxu0 %v1908
  %2031 = vmatpush1.bf16.msra.mxu0 %v1907
  %2032 = vmatprep.subr.bf16.mxu0 %v1906
  %2033 = vmatpush1.bf16.msra.mxu0 %v1905
  %2034 = vmatprep.subr.bf16.mxu0 %v1904
  %2035 = vmatpush1.bf16.msra.mxu0 %v1903
  %2036 = vmatprep.subr.bf16.mxu0 %v1902
  %2037 = vmatpush1.bf16.msra.mxu0 %v1901
  %2038 = vmatprep.subr.bf16.mxu0 %v1900
  %2039 = vmatpush1.bf16.msra.mxu0 %v1899
  %2040 = vmatprep.subr.bf16.mxu0 %v1898
  %2041 = vmatpush1.bf16.msra.mxu0 %v1897
  %2042 = vmatprep.subr.bf16.mxu0 %v1896
  %2043 = vmatpush1.bf16.msra.mxu0 %v1895
  %2044 = vmatprep.subr.bf16.mxu0 %v1894
  %2045 = vmatpush1.bf16.msra.mxu0 %v1893
  %2046 = vmatprep.subr.bf16.mxu0 %v1924
  %2047 = vmatpush2.bf16.msra.mxu0 %v1923
  %2048 = vmatprep.subr.bf16.mxu0 %v1922
  %2049 = vmatpush2.bf16.msra.mxu0 %v1921
  %2050 = vmatprep.subr.bf16.mxu0 %v1920
  %2051 = vmatpush2.bf16.msra.mxu0 %v1919
  %2052 = vmatprep.subr.bf16.mxu0 %v1918
  %2053 = vmatpush2.bf16.msra.mxu0 %v1917
  %2054 = vmatprep.subr.bf16.mxu0 %v1916
  %2055 = vmatpush2.bf16.msra.mxu0 %v1915
  %2056 = vmatprep.subr.bf16.mxu0 %v1914
  %2057 = vmatpush2.bf16.msra.mxu0 %v1913
  %2058 = vmatprep.subr.bf16.mxu0 %v1912
  %2059 = vmatpush2.bf16.msra.mxu0 %v1911
  %2060 = vmatprep.subr.bf16.mxu0 %v1910
  %2061 = vmatpush2.bf16.msra.mxu0 %v1909
  %2062 = vmatprep.mubr.bf16.mxu0 %v1592
  %2063 = vmatmul.mubr.bf16.gmra.mxu0 %v1591
  %v2064 = vpop.f32.mrf.mxu0
  %v2065 = vadd.f32 %v2024, %v2064
  %v2066 = vpop.f32.mrf.mxu0
  %v2067 = vadd.f32 %v2026, %v2066
  %v2068 = vpop.f32.mrf.mxu0
  %v2069 = vpop.f32.mrf.mxu0
  %2070 = vdwg.mxu0
  %v2071 = vmax.f32 %v2065, 0.0
  %v2072 = vmax.f32 %v2067, 0.0
  %v2073 = vpack.c.bf16 %v2071, %v2071
  %v2074 = vpack.c.bf16 %v2072, %v2072
  %v2075 = vld [vmem:[%s5] sm:$0xf]
  %v2076 = vld [vmem:[%s5 + $0x4] sm:$0xf]
  %v2077 = vld [vmem:[%s5 + $0x8] sm:$0xf]
  %v2078 = vld [vmem:[%s5 + $0xc] sm:$0xf]
  %v2079 = vld [vmem:[%s5 + $0x10] sm:$0xf]
  %v2080 = vld [vmem:[%s5 + $0x14] sm:$0xf]
  %v2081 = vld [vmem:[%s5 + $0x18] sm:$0xf]
  %v2082 = vld [vmem:[%s5 + $0x1c] sm:$0xf]
  %v2083 = vld [vmem:[%s5 + $0x20] sm:$0xf]
  %v2084 = vld [vmem:[%s5 + $0x24] sm:$0xf]
  %v2085 = vld [vmem:[%s5 + $0x28] sm:$0xf]
  %v2086 = vld [vmem:[%s5 + $0x2c] sm:$0xf]
  %v2087 = vld [vmem:[%s5 + $0x30] sm:$0xf]
  %v2088 = vld [vmem:[%s5 + $0x34] sm:$0xf]
  %v2089 = vld [vmem:[%s5 + $0x38] sm:$0xf]
  %v2090 = vld [vmem:[%s5 + $0x3c] sm:$0xf]
  %v2091 = vld [vmem:[%s5 + $0x40] sm:$0xf]
  %v2092 = vld [vmem:[%s5 + $0x44] sm:$0xf]
  %v2093 = vld [vmem:[%s5 + $0x48] sm:$0xf]
  %v2094 = vld [vmem:[%s5 + $0x4c] sm:$0xf]
  %v2095 = vld [vmem:[%s5 + $0x50] sm:$0xf]
  %v2096 = vld [vmem:[%s5 + $0x54] sm:$0xf]
  %v2097 = vld [vmem:[%s5 + $0x58] sm:$0xf]
  %v2098 = vld [vmem:[%s5 + $0x5c] sm:$0xf]
  %v2099 = vld [vmem:[%s5 + $0x60] sm:$0xf]
  %v2100 = vld [vmem:[%s5 + $0x64] sm:$0xf]
  %v2101 = vld [vmem:[%s5 + $0x68] sm:$0xf]
  %v2102 = vld [vmem:[%s5 + $0x6c] sm:$0xf]
  %v2103 = vld [vmem:[%s5 + $0x70] sm:$0xf]
  %v2104 = vld [vmem:[%s5 + $0x74] sm:$0xf]
  %v2105 = vld [vmem:[%s5 + $0x78] sm:$0xf]
  %v2106 = vld [vmem:[%s5 + $0x7c] sm:$0xf]
  %v2107 = vld [vmem:[%s6] sm:$0x1]
  %v2109 = vlaneseq
  %v2110 = vshrl.u32 %v2109, 7
  %v2111 = vsub.s32 0, %v2110
  %v2112 = vrot.slane %v2107, %v2111
  %v2146 = vunpack.c.l.b16 %v2075
  %v2147 = vunpack.c.l.b16 %v2076
  %v2148 = vunpack.c.l.b16 %v2077
  %v2149 = vunpack.c.l.b16 %v2078
  %v2150 = vunpack.c.l.b16 %v2079
  %v2151 = vunpack.c.l.b16 %v2080
  %v2152 = vunpack.c.l.b16 %v2081
  %v2153 = vunpack.c.l.b16 %v2082
  %v2154 = vunpack.c.l.b16 %v2083
  %v2155 = vunpack.c.l.b16 %v2084
  %v2156 = vunpack.c.l.b16 %v2085
  %v2157 = vunpack.c.l.b16 %v2086
  %v2158 = vunpack.c.l.b16 %v2087
  %v2159 = vunpack.c.l.b16 %v2088
  %v2160 = vunpack.c.l.b16 %v2089
  %v2161 = vunpack.c.l.b16 %v2090
  %v2162 = vunpack.c.l.b16 %v2091
  %v2163 = vunpack.c.l.b16 %v2092
  %v2164 = vunpack.c.l.b16 %v2093
  %v2165 = vunpack.c.l.b16 %v2094
  %v2166 = vunpack.c.l.b16 %v2095
  %v2167 = vunpack.c.l.b16 %v2096
  %v2168 = vunpack.c.l.b16 %v2097
  %v2169 = vunpack.c.l.b16 %v2098
  %v2170 = vunpack.c.l.b16 %v2099
  %v2171 = vunpack.c.l.b16 %v2100
  %v2172 = vunpack.c.l.b16 %v2101
  %v2173 = vunpack.c.l.b16 %v2102
  %v2174 = vunpack.c.l.b16 %v2103
  %v2175 = vunpack.c.l.b16 %v2104
  %v2176 = vunpack.c.l.b16 %v2105
  %v2177 = vunpack.c.l.b16 %v2106
  %v2178 = vpack.c.b16 %v2147, %v2146
  %v2179 = vpack.c.b16 %v2149, %v2148
  %v2180 = vpack.c.b16 %v2151, %v2150
  %v2181 = vpack.c.b16 %v2153, %v2152
  %v2182 = vpack.c.b16 %v2155, %v2154
  %v2183 = vpack.c.b16 %v2157, %v2156
  %v2184 = vpack.c.b16 %v2159, %v2158
  %v2185 = vpack.c.b16 %v2161, %v2160
  %v2186 = vpack.c.b16 %v2163, %v2162
  %v2187 = vpack.c.b16 %v2165, %v2164
  %v2188 = vpack.c.b16 %v2167, %v2166
  %v2189 = vpack.c.b16 %v2169, %v2168
  %v2190 = vpack.c.b16 %v2171, %v2170
  %v2191 = vpack.c.b16 %v2173, %v2172
  %v2192 = vpack.c.b16 %v2175, %v2174
  %v2193 = vpack.c.b16 %v2177, %v2176
  %2210 = vmatprep.subr.bf16.mxu0 0
  %2211 = vmatpush1.bf16.msra.mxu0 %v2185
  %2212 = vmatprep.subr.bf16.mxu0 0
  %2213 = vmatpush1.bf16.msra.mxu0 %v2184
  %2214 = vmatprep.subr.bf16.mxu0 0
  %2215 = vmatpush1.bf16.msra.mxu0 %v2183
  %2216 = vmatprep.subr.bf16.mxu0 0
  %2217 = vmatpush1.bf16.msra.mxu0 %v2182
  %2218 = vmatprep.subr.bf16.mxu0 0
  %2219 = vmatpush1.bf16.msra.mxu0 %v2181
  %2220 = vmatprep.subr.bf16.mxu0 0
  %2221 = vmatpush1.bf16.msra.mxu0 %v2180
  %2222 = vmatprep.subr.bf16.mxu0 0
  %2223 = vmatpush1.bf16.msra.mxu0 %v2179
  %2224 = vmatprep.subr.bf16.mxu0 0
  %2225 = vmatpush1.bf16.msra.mxu0 %v2178
  %2226 = vmatprep.subr.bf16.mxu0 0
  %2227 = vmatpush2.bf16.msra.mxu0 %v2193
  %2228 = vmatprep.subr.bf16.mxu0 0
  %2229 = vmatpush2.bf16.msra.mxu0 %v2192
  %2230 = vmatprep.subr.bf16.mxu0 0
  %2231 = vmatpush2.bf16.msra.mxu0 %v2191
  %2232 = vmatprep.subr.bf16.mxu0 0
  %2233 = vmatpush2.bf16.msra.mxu0 %v2190
  %2234 = vmatprep.subr.bf16.mxu0 0
  %2235 = vmatpush2.bf16.msra.mxu0 %v2189
  %2236 = vmatprep.subr.bf16.mxu0 0
  %2237 = vmatpush2.bf16.msra.mxu0 %v2188
  %2238 = vmatprep.subr.bf16.mxu0 0
  %2239 = vmatpush2.bf16.msra.mxu0 %v2187
  %2240 = vmatprep.subr.bf16.mxu0 0
  %2241 = vmatpush2.bf16.msra.mxu0 %v2186
  %2242 = vmatprep.mubr.bf16.mxu0 %v2074
  %2243 = vmatmul.mubr.bf16.gmra.mxu0 %v2073
  %v2244 = vpop.f32.mrf.mxu0
  %v2245 = vadd.f32 %v2112, %v2244
  %v2246 = vpop.f32.mrf.mxu0
  %v2247 = vpop.f32.mrf.mxu0
  %v2248 = vpop.f32.mrf.mxu0
  %2249 = vdwg.mxu0
  %2250 = vst [vmem:[%s7] sm:$0xff] %v2245
  // Predicated region
  $region30: #{mlp_forward.1} parent=0 // pred_check
    _
  $region31: #{mlp_forward.1} parent=0 // pred_check_branch
    %2252 = sbr.rel (0) target = $region33
  $region32: #{mlp_forward.1} parent=0 // pred_region
    _
  $region33: #{mlp_forward.1} parent=0 // pred_fallthru
    _
  // Predicated region
  $region34: #{mlp_forward.1} parent=0 // pred_check
    _
  $region35: #{mlp_forward.1} parent=0 // pred_check_branch
    %2254 = sbr.rel (0) target = $region37
  $region36: #{mlp_forward.1} parent=0 // pred_region
    _
  $region37: #{mlp_forward.1} parent=0 // pred_fallthru
    _

</llo_original>
